<compile_context>
chip_gen: v6e
topology: v6e:2x2x1
jax: 0.10.0
libtpu: 0.0.40
codegen_flags: <defaults>
</compile_context>

<pallas_src>
import functools
import math

import jax
import jax.numpy as jnp
import numpy as np
from jax import lax
from jax.experimental import pallas as pl
from jax.experimental.pallas import tpu as pltpu


def _layernorm(v, w, b, eps=1e-5):
    mu = jnp.mean(v, axis=-1, keepdims=True)
    var = jnp.mean(jnp.square(v - mu), axis=-1, keepdims=True)
    return (v - mu) * lax.rsqrt(var + eps) * w + b


def _split_heads(flat, n_heads, d):
    # (T, H*d) -> (H, T, d) via static lane slices + leading-axis stack.
    # (Avoids minor-dim reshapes; all subsequent math is head-batched.)
    return jnp.stack([flat[:, h * d:(h + 1) * d] for h in range(n_heads)], axis=0)


def _phi(u):
    # Quadratic feature map phi(u) = [1, u, vec(u u^T)/sqrt(2)] along lanes.
    # u: (H, T, d) f32 -> (H, T, 1 + d + d*d) f32. Any consistent flattening of
    # the outer product is valid: phi(q).phi(k) only depends on the (a,b) sum.
    h, t, d = u.shape
    ones = jnp.ones((h, t, 1), jnp.float32)
    scale = 1.0 / math.sqrt(2.0)
    outer = [u * (u[:, :, a:a + 1] * scale) for a in range(d)]
    return jnp.concatenate([ones, u] + outer, axis=-1)


def _block_kernel(x_ref, wqkv_ref, bqkv_ref, ln1w_ref, ln1b_ref,
                  ln2w_ref, ln2b_ref, w1_ref, b1_ref, w2_ref, b2_ref,
                  out_ref, s_aug_ref, kprev_ref, vprev_ref, *,
                  n_heads, d_proj, d_head, window, tq, compute_dtype):
    f32 = jnp.float32
    cd = compute_dtype
    H, dp, dh = n_heads, d_proj, d_head
    qt = pl.program_id(1)

    # Carried linear-attention state + previous-tile K/V are (re)initialized at
    # the first query tile of every batch row (q-tile axis is sequential).
    @pl.when(qt == 0)
    def _():
        s_aug_ref[...] = jnp.zeros_like(s_aug_ref)
        kprev_ref[...] = jnp.zeros_like(kprev_ref)
        vprev_ref[...] = jnp.zeros_like(vprev_ref)

    x = x_ref[0].astype(f32)                                     # (TQ, D)

    # ---- LayerNorm 1 (f32 stats) + fused QKV projection (one wide matmul) ----
    xn1 = _layernorm(x, ln1w_ref[...], ln1b_ref[...])
    qkv = jnp.dot(xn1.astype(cd), wqkv_ref[...],
                  preferred_element_type=f32) + bqkv_ref[...]    # (TQ, H*(2dp+dh))

    q = _split_heads(qkv[:, :H * dp], H, dp)                     # (H, TQ, dp)
    k_cur = _split_heads(qkv[:, H * dp:2 * H * dp], H, dp)       # (H, TQ, dp)
    v_cur = _split_heads(qkv[:, 2 * H * dp:], H, dh)             # (H, TQ, dh)

    # Keys/values visible to the sliding-window branch: [prev tile | this tile]
    k_cat = jnp.concatenate([kprev_ref[...], k_cur], axis=1)     # (H, 2TQ, dp)
    v_cat = jnp.concatenate([vprev_ref[...], v_cur], axis=1)     # (H, 2TQ, dh)

    qk_cat = jnp.einsum('hqd,hkd->hqk', q.astype(cd), k_cat.astype(cd),
                        preferred_element_type=f32)              # (H, TQ, 2TQ) f32

    # ---- sliding-window softmax branch (band-restricted, f32) ---------------
    q_glob = qt * tq + lax.broadcasted_iota(jnp.int32, (tq, 2 * tq), 0)
    k_glob = (qt - 1) * tq + lax.broadcasted_iota(jnp.int32, (tq, 2 * tq), 1)
    band = ((k_glob <= q_glob) & (k_glob >= q_glob - (window - 1))
            & (k_glob >= 0))[None]                               # (1, TQ, 2TQ)
    scores = jnp.where(band, qk_cat, -jnp.inf)
    m = jnp.max(scores, axis=-1, keepdims=True)   # diagonal is always in-band
    e = jnp.exp(scores - m)
    p = e * pl.reciprocal(jnp.sum(e, axis=-1, keepdims=True), approx=True)
    y_local = jnp.einsum('hqk,hkd->hqd', p.astype(cd), v_cat.astype(cd),
                         preferred_element_type=f32)             # (H, TQ, dh)

    # ---- Based linear-attention branch (chunked, carried feature-map state) --
    ones_col = jnp.ones((H, tq, 1), f32)
    v_aug = jnp.concatenate([v_cur, ones_col], axis=-1)          # (H, TQ, dh+1)

    qk_cur = qk_cat[:, :, tq:]                                   # (H, TQ, TQ)
    causal = (lax.broadcasted_iota(jnp.int32, (tq, tq), 1)
              <= lax.broadcasted_iota(jnp.int32, (tq, tq), 0))[None]
    a_lin = jnp.where(causal, 1.0 + qk_cur + 0.5 * qk_cur * qk_cur, 0.0)

    phi_q = _phi(q)                                              # (H, TQ, d_tilde)
    nd = jnp.einsum('hqk,hkf->hqf', a_lin.astype(cd), v_aug.astype(cd),
                    preferred_element_type=f32)                  # intra-tile
    nd = nd + jnp.einsum('hqt,htf->hqf', phi_q.astype(cd),
                         s_aug_ref[...].astype(cd),
                         preferred_element_type=f32)             # earlier tiles
    y_linear = nd[..., :dh] * pl.reciprocal(nd[..., dh:] + 1e-8, approx=True)

    # ---- merge heads into a lane-dense (TQ, D) slab + residual + LN2 + MLP ---
    y = y_linear + y_local                                       # (H, TQ, dh)
    attn = jnp.concatenate([y[h] for h in range(H)], axis=-1)    # (TQ, H*dh)

    res1 = x + attn
    xn2 = _layernorm(res1, ln2w_ref[...], ln2b_ref[...])
    hid = jnp.maximum(jnp.dot(xn2.astype(cd), w1_ref[...],
                              preferred_element_type=f32) + b1_ref[...], 0.0)
    # Dropout layers: identity (eval mode).
    mlp = jnp.dot(hid.astype(cd), w2_ref[...],
                  preferred_element_type=f32) + b2_ref[...]
    out_ref[0] = (res1 + mlp).astype(out_ref.dtype)

    # ---- carry state forward for the remaining query tiles of this row -------
    @pl.when(qt != pl.num_programs(1) - 1)
    def _():
        phi_k = _phi(k_cur)                                      # (H, TQ, d_tilde)
        s_aug_ref[...] += jnp.einsum('hkt,hkf->htf', phi_k.astype(cd),
                                     v_aug.astype(cd),
                                     preferred_element_type=f32)
        kprev_ref[...] = k_cur
        vprev_ref[...] = v_cur


def _choose_tq(n, window):
    # Largest multiple-of-8 divisor of n that is >= window and <= 256 (bigger
    # tiles amortize the ~0.35us per-grid-step overhead); else the full seq.
    best = None
    for t in range(8, min(n, 256) + 1, 8):
        if n % t == 0 and t >= window:
            best = t
    return best if best is not None else n


def based_transformer_block(x, params, *, n_heads, d_proj, d_head, window,
                            tile_q=None, compute_dtype=jnp.float32):
    B, N, D = x.shape
    assert D == n_heads * d_head
    tq = tile_q if tile_q is not None else _choose_tq(N, window)
    assert N % tq == 0 and (tq == N or tq % 8 == 0)
    # The window branch looks back at most one tile.
    assert tq == N or window <= tq
    d_tilde = 1 + d_proj + d_proj * d_proj
    f32 = jnp.float32

    # Fused QKV weight -> a single wide (D, H*(2*d_proj + d_head)) MXU matmul.
    wqkv = jnp.concatenate([params["wq"], params["wk"], params["wv"]],
                           axis=1).astype(compute_dtype)
    bqkv = jnp.concatenate([params["bq"], params["bk"], params["bv"]],
                           axis=1).astype(f32)
    weights = [
        wqkv, bqkv,
        params["ln1_w"].astype(f32), params["ln1_b"].astype(f32),
        params["ln2_w"].astype(f32), params["ln2_b"].astype(f32),
        params["w1"].astype(compute_dtype), params["b1"].astype(f32),
        params["w2"].astype(compute_dtype), params["b2"].astype(f32),
    ]

    kernel = functools.partial(
        _block_kernel, n_heads=n_heads, d_proj=d_proj, d_head=d_head,
        window=window, tq=tq, compute_dtype=compute_dtype)

    in_specs = [pl.BlockSpec((1, tq, D), lambda b, q: (b, q, 0))]
    # Constant index_map => each weight is DMA'd once and stays VMEM-resident
    # across the whole grid (no per-tile re-fetch of QKV / MLP weights).
    in_specs += [pl.BlockSpec(w.shape, lambda b, q: (0, 0)) for w in weights]

    return pl.pallas_call(
        kernel,
        out_shape=jax.ShapeDtypeStruct((B, N, D), x.dtype),
        grid=(B, N // tq),
        in_specs=in_specs,
        out_specs=pl.BlockSpec((1, tq, D), lambda b, q: (b, q, 0)),
        scratch_shapes=[
            pltpu.VMEM((n_heads, d_tilde, d_head + 1), f32),  # S_aug = [S | z]
            pltpu.VMEM((n_heads, tq, d_proj), f32),           # previous-tile K
            pltpu.VMEM((n_heads, tq, d_head), f32),           # previous-tile V
        ],
        compiler_params=pltpu.CompilerParams(
            # Batch axis parallel (megacore on v7x); q-tile axis sequential
            # because the linear-attention state is carried across tiles.
            dimension_semantics=("parallel", "arbitrary"),
            # Explicit budget with headroom under v7x's 64 MiB physical VMEM.
            vmem_limit_bytes=48 * 1024 * 1024,
        ),
    )(x, *weights)


def reference_forward(x, params, *, n_heads, d_proj, d_head, window):
    """Plain-JAX mirror of the PyTorch forward (eval mode), for verification."""
    B, N, D = x.shape

    def ln(v, w, b):
        mu = v.mean(-1, keepdims=True)
        var = ((v - mu) ** 2).mean(-1, keepdims=True)
        return (v - mu) / jnp.sqrt(var + 1e-5) * w[0] + b[0]

    xn1 = ln(x, params["ln1_w"], params["ln1_b"])
    Q = xn1 @ params["wq"] + params["bq"][0]
    K = xn1 @ params["wk"] + params["bk"][0]
    V = xn1 @ params["wv"] + params["bv"][0]
    Q = Q.reshape(B, N, n_heads, d_proj).transpose(0, 2, 1, 3)
    K = K.reshape(B, N, n_heads, d_proj).transpose(0, 2, 1, 3)
    V = V.reshape(B, N, n_heads, d_head).transpose(0, 2, 1, 3)

    sqrt_half = 1.0 / math.sqrt(2.0)
    d_tilde = 1 + d_proj + d_proj * d_proj
    s = jnp.zeros((B, n_heads, d_tilde, d_head), jnp.float32)
    z = jnp.zeros((B, n_heads, d_tilde), jnp.float32)
    outs = []
    for i in range(N):
        q_i = Q[:, :, i, :]
        k_i = K[:, :, i, :]
        v_i = V[:, :, i, :]
        one = jnp.ones((B, n_heads, 1), jnp.float32)
        phi_k = jnp.concatenate(
            [one, k_i,
             (k_i[..., :, None] * k_i[..., None, :]).reshape(B, n_heads, -1) * sqrt_half],
            axis=-1)
        z = z + phi_k
        s = s + phi_k[..., None] * v_i[..., None, :]
        phi_q = jnp.concatenate(
            [one, q_i,
             (q_i[..., :, None] * q_i[..., None, :]).reshape(B, n_heads, -1) * sqrt_half],
            axis=-1)
        num = (phi_q[..., None] * s).sum(-2)
        den = (phi_q * z).sum(-1, keepdims=True) + 1e-8
        y_lin = num / den

        start = max(0, i - window + 1)
        K_win = K[:, :, start:i + 1, :]
        V_win = V[:, :, start:i + 1, :]
        sc = (q_i[..., None, :] * K_win).sum(-1)
        wgt = jax.nn.softmax(sc, axis=-1)
        y_loc = (wgt[..., None] * V_win).sum(-2)
        outs.append(y_lin + y_loc)

    attn = jnp.stack(outs, axis=2)                      # (B, H, N, d_head)
    attn = attn.transpose(0, 2, 1, 3).reshape(B, N, n_heads * d_head)

    res1 = x + attn
    xn2 = ln(res1, params["ln2_w"], params["ln2_b"])
    h = jax.nn.relu(xn2 @ params["w1"] + params["b1"][0])
    mlp = h @ params["w2"] + params["b2"][0]
    return res1 + mlp


if __name__ == "__main__":
    B, N, D = 2, 16, 16
    H = 2
    window = 8
    mlp_ratio = 4.0
    hidden = int(D * mlp_ratio)
    d_head = D // H
    d_proj = d_head                      # default in BasedAttention

    key = jax.random.PRNGKey(0)
    ks = jax.random.split(key, 12)

    def uinit(k, shape, fan_in):
        bound = 1.0 / math.sqrt(fan_in)
        return jax.random.uniform(k, shape, jnp.float32, -bound, bound)

    params = {
        "ln1_w": jnp.ones((1, D), jnp.float32),
        "ln1_b": jnp.zeros((1, D), jnp.float32),
        "wq": uinit(ks[0], (D, H * d_proj), D),
        "bq": uinit(ks[1], (1, H * d_proj), D),
        "wk": uinit(ks[2], (D, H * d_proj), D),
        "bk": uinit(ks[3], (1, H * d_proj), D),
        "wv": uinit(ks[4], (D, H * d_head), D),
        "bv": uinit(ks[5], (1, H * d_head), D),
        "ln2_w": jnp.ones((1, D), jnp.float32),
        "ln2_b": jnp.zeros((1, D), jnp.float32),
        "w1": uinit(ks[6], (D, hidden), D),
        "b1": uinit(ks[7], (1, hidden), D),
        "w2": uinit(ks[8], (hidden, D), hidden),
        "b2": uinit(ks[9], (1, D), hidden),
    }

    x = jax.random.normal(ks[10], (B, N, D), jnp.float32)

    ref = reference_forward(
        x, params, n_heads=H, d_proj=d_proj, d_head=d_head, window=window)

    # f32 compute path; tile_q=8 -> two query tiles per batch, exercising the
    # carried linear-attention state and the prev-tile K/V window buffer.
    out = based_transformer_block(
        x, params, n_heads=H, d_proj=d_proj, d_head=d_head, window=window,
        tile_q=8, compute_dtype=jnp.float32)
    out = jax.block_until_ready(out)
    # Tolerance covers pl.reciprocal(approx=True) and chunked-sum reordering.
    np.testing.assert_allclose(np.asarray(out), np.asarray(ref),
                               rtol=2e-2, atol=2e-2)
    assert out.shape == (B, N, D) and out.dtype == jnp.float32

    # bf16 matmul-input fast path (f32 accumulation) — loose smoke-test check;
    # the f32 run above is the parity check.
    out_bf16 = based_transformer_block(
        x, params, n_heads=H, d_proj=d_proj, d_head=d_head, window=window,
        tile_q=8, compute_dtype=jnp.bfloat16)
    out_bf16 = jax.block_until_ready(out_bf16)
    np.testing.assert_allclose(np.asarray(out_bf16), np.asarray(ref),
                               rtol=1e-1, atol=1e-1)

    print("KERNEL_OK")
</pallas_src>

<mosaic_0001>
module attributes {stable_mosaic.version = 11 : i64} {
  func.func @_block_kernel(%arg0: i32, %arg1: i32, %arg2: memref<1x8x16xf32, #tpu.memory_space<vmem>>, %arg3: memref<16x48xf32, #tpu.memory_space<vmem>>, %arg4: memref<1x48xf32, #tpu.memory_space<vmem>>, %arg5: memref<1x16xf32, #tpu.memory_space<vmem>>, %arg6: memref<1x16xf32, #tpu.memory_space<vmem>>, %arg7: memref<1x16xf32, #tpu.memory_space<vmem>>, %arg8: memref<1x16xf32, #tpu.memory_space<vmem>>, %arg9: memref<16x64xf32, #tpu.memory_space<vmem>>, %arg10: memref<1x64xf32, #tpu.memory_space<vmem>>, %arg11: memref<64x16xf32, #tpu.memory_space<vmem>>, %arg12: memref<1x16xf32, #tpu.memory_space<vmem>>, %arg13: memref<1x8x16xf32, #tpu.memory_space<vmem>>, %arg14: memref<2x73x9xf32, #tpu.memory_space<vmem>>, %arg15: memref<2x8x8xf32, #tpu.memory_space<vmem>>, %arg16: memref<2x8x8xf32, #tpu.memory_space<vmem>>) attributes {dimension_semantics = [#tpu.dimension_semantics<parallel>, #tpu.dimension_semantics<arbitrary>], iteration_bounds = array<i64: 2, 2>, scalar_prefetch = 0 : i64, scratch_operands = 3 : i64, tpu.core_type = #tpu.core_type<tc>, window_params = [{transform_indices = @transform_0, window_bounds = array<i64: 1, 8, 16>}, {pipeline_mode = #tpu.pipeline_mode<synchronous>, transform_indices = @transform_1, window_bounds = array<i64: 16, 48>}, {pipeline_mode = #tpu.pipeline_mode<synchronous>, transform_indices = @transform_2, window_bounds = array<i64: 1, 48>}, {pipeline_mode = #tpu.pipeline_mode<synchronous>, transform_indices = @transform_3, window_bounds = array<i64: 1, 16>}, {pipeline_mode = #tpu.pipeline_mode<synchronous>, transform_indices = @transform_4, window_bounds = array<i64: 1, 16>}, {pipeline_mode = #tpu.pipeline_mode<synchronous>, transform_indices = @transform_5, window_bounds = array<i64: 1, 16>}, {pipeline_mode = #tpu.pipeline_mode<synchronous>, transform_indices = @transform_6, window_bounds = array<i64: 1, 16>}, {pipeline_mode = #tpu.pipeline_mode<synchronous>, transform_indices = @transform_7, window_bounds = array<i64: 16, 64>}, {pipeline_mode = #tpu.pipeline_mode<synchronous>, transform_indices = @transform_8, window_bounds = array<i64: 1, 64>}, {pipeline_mode = #tpu.pipeline_mode<synchronous>, transform_indices = @transform_9, window_bounds = array<i64: 64, 16>}, {pipeline_mode = #tpu.pipeline_mode<synchronous>, transform_indices = @transform_10, window_bounds = array<i64: 1, 16>}, {transform_indices = @transform_11, window_bounds = array<i64: 1, 8, 16>}]} {
    %c0_i32 = arith.constant 0 : i32
    %0 = arith.cmpi eq, %arg1, %c0_i32 : i32
    %1 = arith.extui %0 : i1 to i32
    %c0_i32_0 = arith.constant 0 : i32
    %2 = arith.cmpi ne, %1, %c0_i32_0 : i32
    scf.if %2 {
      %cst_73 = arith.constant 0.000000e+00 : f32
      %210 = vector.broadcast %cst_73 : f32 to vector<2x73x9xf32>
      %c0_74 = arith.constant 0 : index
      %c0_75 = arith.constant 0 : index
      %c0_76 = arith.constant 0 : index
      %211 = vector.load %arg14[%c0_74, %c0_75, %c0_76] : memref<2x73x9xf32, #tpu.memory_space<vmem>>, vector<2x73x9xf32>
      tpu.vector_store %arg14[%c0_74, %c0_75, %c0_76], %210 {strides = array<i32>} : memref<2x73x9xf32, #tpu.memory_space<vmem>>, vector<2x73x9xf32>,
      %cst_77 = arith.constant 0.000000e+00 : f32
      %212 = vector.broadcast %cst_77 : f32 to vector<2x8x8xf32>
      %c0_78 = arith.constant 0 : index
      %c0_79 = arith.constant 0 : index
      %c0_80 = arith.constant 0 : index
      %213 = vector.load %arg15[%c0_78, %c0_79, %c0_80] : memref<2x8x8xf32, #tpu.memory_space<vmem>>, vector<2x8x8xf32>
      tpu.vector_store %arg15[%c0_78, %c0_79, %c0_80], %212 {strides = array<i32>} : memref<2x8x8xf32, #tpu.memory_space<vmem>>, vector<2x8x8xf32>,
      %cst_81 = arith.constant 0.000000e+00 : f32
      %214 = vector.broadcast %cst_81 : f32 to vector<2x8x8xf32>
      %c0_82 = arith.constant 0 : index
      %c0_83 = arith.constant 0 : index
      %c0_84 = arith.constant 0 : index
      %215 = vector.load %arg16[%c0_82, %c0_83, %c0_84] : memref<2x8x8xf32, #tpu.memory_space<vmem>>, vector<2x8x8xf32>
      tpu.vector_store %arg16[%c0_82, %c0_83, %c0_84], %214 {strides = array<i32>} : memref<2x8x8xf32, #tpu.memory_space<vmem>>, vector<2x8x8xf32>,
    } else {
    }
    %c0 = arith.constant 0 : index
    %c0_1 = arith.constant 0 : index
    %c0_2 = arith.constant 0 : index
    %3 = vector.load %arg2[%c0, %c0_1, %c0_2] : memref<1x8x16xf32, #tpu.memory_space<vmem>>, vector<1x8x16xf32>
    %4 = vector.shape_cast %3 : vector<1x8x16xf32> to vector<8x16xf32>
    %c0_3 = arith.constant 0 : index
    %c0_4 = arith.constant 0 : index
    %5 = vector.load %arg5[%c0_3, %c0_4] : memref<1x16xf32, #tpu.memory_space<vmem>>, vector<1x16xf32>
    %c0_5 = arith.constant 0 : index
    %c0_6 = arith.constant 0 : index
    %6 = vector.load %arg6[%c0_5, %c0_6] : memref<1x16xf32, #tpu.memory_space<vmem>>, vector<1x16xf32>
    %cst = arith.constant dense<0.000000e+00> : vector<8xf32>
    %7 = vector.multi_reduction <add>, %4, %cst [1] : vector<8x16xf32> to vector<8xf32>
    %8 = vector.shape_cast %7 : vector<8xf32> to vector<8x1xf32>
    %cst_7 = arith.constant 1.600000e+01 : f32
    %9 = vector.broadcast %cst_7 : f32 to vector<8x1xf32>
    %10 = arith.divf %8, %9 : vector<8x1xf32>
    %11 = vector.broadcast %10 : vector<8x1xf32> to vector<8x16xf32>
    %12 = arith.subf %4, %11 : vector<8x16xf32>
    %13 = arith.mulf %12, %12 : vector<8x16xf32>
    %cst_8 = arith.constant dense<0.000000e+00> : vector<8xf32>
    %14 = vector.multi_reduction <add>, %13, %cst_8 [1] : vector<8x16xf32> to vector<8xf32>
    %15 = vector.shape_cast %14 : vector<8xf32> to vector<8x1xf32>
    %cst_9 = arith.constant 1.600000e+01 : f32
    %16 = vector.broadcast %cst_9 : f32 to vector<8x1xf32>
    %17 = arith.divf %15, %16 : vector<8x1xf32>
    %18 = vector.broadcast %10 : vector<8x1xf32> to vector<8x16xf32>
    %19 = arith.subf %4, %18 : vector<8x16xf32>
    %cst_10 = arith.constant 9.99999974E-6 : f32
    %20 = vector.broadcast %cst_10 : f32 to vector<8x1xf32>
    %21 = arith.addf %17, %20 : vector<8x1xf32>
    %22 = math.rsqrt %21 : vector<8x1xf32>
    %23 = vector.broadcast %22 : vector<8x1xf32> to vector<8x16xf32>
    %24 = arith.mulf %19, %23 : vector<8x16xf32>
    %25 = vector.broadcast %5 : vector<1x16xf32> to vector<8x16xf32>
    %26 = arith.mulf %24, %25 : vector<8x16xf32>
    %27 = vector.broadcast %6 : vector<1x16xf32> to vector<8x16xf32>
    %28 = arith.addf %26, %27 : vector<8x16xf32>
    %c0_11 = arith.constant 0 : index
    %c0_12 = arith.constant 0 : index
    %29 = vector.load %arg3[%c0_11, %c0_12] : memref<16x48xf32, #tpu.memory_space<vmem>>, vector<16x48xf32>
    %cst_13 = arith.constant dense<0.000000e+00> : vector<8x48xf32>
    %30 = tpu.matmul %28, %29, %cst_13 {dimension_numbers = #tpu.dot_dimension_numbers<[1], [0], [0], [1], [0, 0, 1, 1], [], []>} : vector<8x16xf32>, vector<16x48xf32>, vector<8x48xf32> -> vector<8x48xf32>
    %c0_14 = arith.constant 0 : index
    %c0_15 = arith.constant 0 : index
    %31 = vector.load %arg4[%c0_14, %c0_15] : memref<1x48xf32, #tpu.memory_space<vmem>>, vector<1x48xf32>
    %32 = vector.broadcast %31 : vector<1x48xf32> to vector<8x48xf32>
    %33 = arith.addf %30, %32 : vector<8x48xf32>
    %34 = vector.extract_strided_slice %33 {offsets = [0, 0], sizes = [8, 16], strides = [1, 1]} : vector<8x48xf32> to vector<8x16xf32>
    %35 = vector.extract_strided_slice %34 {offsets = [0, 0], sizes = [8, 8], strides = [1, 1]} : vector<8x16xf32> to vector<8x8xf32>
    %36 = vector.extract_strided_slice %34 {offsets = [0, 8], sizes = [8, 8], strides = [1, 1]} : vector<8x16xf32> to vector<8x8xf32>
    %37 = vector.shape_cast %35 : vector<8x8xf32> to vector<1x8x8xf32>
    %38 = vector.shape_cast %36 : vector<8x8xf32> to vector<1x8x8xf32>
    %39 = tpu.concatenate %37, %38 in 0 : vector<1x8x8xf32>, vector<1x8x8xf32> -> vector<2x8x8xf32>
    %40 = vector.extract_strided_slice %33 {offsets = [0, 16], sizes = [8, 16], strides = [1, 1]} : vector<8x48xf32> to vector<8x16xf32>
    %41 = vector.extract_strided_slice %40 {offsets = [0, 0], sizes = [8, 8], strides = [1, 1]} : vector<8x16xf32> to vector<8x8xf32>
    %42 = vector.extract_strided_slice %40 {offsets = [0, 8], sizes = [8, 8], strides = [1, 1]} : vector<8x16xf32> to vector<8x8xf32>
    %43 = vector.shape_cast %41 : vector<8x8xf32> to vector<1x8x8xf32>
    %44 = vector.shape_cast %42 : vector<8x8xf32> to vector<1x8x8xf32>
    %45 = tpu.concatenate %43, %44 in 0 : vector<1x8x8xf32>, vector<1x8x8xf32> -> vector<2x8x8xf32>
    %46 = vector.extract_strided_slice %33 {offsets = [0, 32], sizes = [8, 16], strides = [1, 1]} : vector<8x48xf32> to vector<8x16xf32>
    %47 = vector.extract_strided_slice %46 {offsets = [0, 0], sizes = [8, 8], strides = [1, 1]} : vector<8x16xf32> to vector<8x8xf32>
    %48 = vector.extract_strided_slice %46 {offsets = [0, 8], sizes = [8, 8], strides = [1, 1]} : vector<8x16xf32> to vector<8x8xf32>
    %49 = vector.shape_cast %47 : vector<8x8xf32> to vector<1x8x8xf32>
    %50 = vector.shape_cast %48 : vector<8x8xf32> to vector<1x8x8xf32>
    %51 = tpu.concatenate %49, %50 in 0 : vector<1x8x8xf32>, vector<1x8x8xf32> -> vector<2x8x8xf32>
    %c0_16 = arith.constant 0 : index
    %c0_17 = arith.constant 0 : index
    %c0_18 = arith.constant 0 : index
    %52 = vector.load %arg15[%c0_16, %c0_17, %c0_18] : memref<2x8x8xf32, #tpu.memory_space<vmem>>, vector<2x8x8xf32>
    %53 = tpu.concatenate %52, %45 in 1 : vector<2x8x8xf32>, vector<2x8x8xf32> -> vector<2x16x8xf32>
    %c0_19 = arith.constant 0 : index
    %c0_20 = arith.constant 0 : index
    %c0_21 = arith.constant 0 : index
    %54 = vector.load %arg16[%c0_19, %c0_20, %c0_21] : memref<2x8x8xf32, #tpu.memory_space<vmem>>, vector<2x8x8xf32>
    %55 = tpu.concatenate %54, %51 in 1 : vector<2x8x8xf32>, vector<2x8x8xf32> -> vector<2x16x8xf32>
    "tpu.trace_start"() <{level = 10 : i32, message = "hqd,hkd->hqk"}> : () -> ()
    %cst_22 = arith.constant dense<0.000000e+00> : vector<2x8x16xf32>
    %56 = tpu.matmul %39, %53, %cst_22 {dimension_numbers = #tpu.dot_dimension_numbers<[2], [2], [1], [1], [0, 0, 0, 1, 1, 1], [0], [0]>} : vector<2x8x8xf32>, vector<2x16x8xf32>, vector<2x8x16xf32> -> vector<2x8x16xf32>
    "tpu.trace_stop"() : () -> ()
    %c8_i32 = arith.constant 8 : i32
    %57 = arith.muli %arg1, %c8_i32 : i32
    %58 = tpu.iota {dimensions = array<i32: 0>} : vector<8x16xi32>
    %59 = vector.broadcast %57 : i32 to vector<8x16xi32>
    %60 = arith.addi %59, %58 : vector<8x16xi32>
    %c1_i32 = arith.constant 1 : i32
    %61 = arith.subi %arg1, %c1_i32 : i32
    %c8_i32_23 = arith.constant 8 : i32
    %62 = arith.muli %61, %c8_i32_23 : i32
    %63 = tpu.iota {dimensions = array<i32: 1>} : vector<8x16xi32>
    %64 = vector.broadcast %62 : i32 to vector<8x16xi32>
    %65 = arith.addi %64, %63 : vector<8x16xi32>
    %66 = arith.cmpi sle, %65, %60 : vector<8x16xi32>
    %c7_i32 = arith.constant 7 : i32
    %67 = vector.broadcast %c7_i32 : i32 to vector<8x16xi32>
    %68 = arith.subi %60, %67 : vector<8x16xi32>
    %69 = arith.cmpi sge, %65, %68 : vector<8x16xi32>
    %70 = arith.andi %66, %69 : vector<8x16xi1>
    %c0_i32_24 = arith.constant 0 : i32
    %71 = vector.broadcast %c0_i32_24 : i32 to vector<8x16xi32>
    %72 = arith.cmpi sge, %65, %71 : vector<8x16xi32>
    %73 = arith.andi %70, %72 : vector<8x16xi1>
    %74 = vector.shape_cast %73 : vector<8x16xi1> to vector<1x8x16xi1>
    %cst_25 = arith.constant 0xFF800000 : f32
    %75 = vector.shape_cast %74 : vector<1x8x16xi1> to vector<1x8x16xi1>
    %76 = vector.broadcast %75 : vector<1x8x16xi1> to vector<2x8x16xi1>
    %77 = vector.broadcast %cst_25 : f32 to vector<2x8x16xf32>
    %78 = arith.select %76, %56, %77 : vector<2x8x16xi1>, vector<2x8x16xf32>
    %cst_26 = arith.constant dense<0xFF800000> : vector<2x8xf32>
    %79 = vector.multi_reduction <maximumf>, %78, %cst_26 [2] : vector<2x8x16xf32> to vector<2x8xf32>
    %80 = vector.shape_cast %79 : vector<2x8xf32> to vector<2x8x1xf32>
    %81 = vector.broadcast %80 : vector<2x8x1xf32> to vector<2x8x16xf32>
    %82 = arith.subf %78, %81 : vector<2x8x16xf32>
    %83 = math.exp %82 : vector<2x8x16xf32>
    %cst_27 = arith.constant dense<0.000000e+00> : vector<2x8xf32>
    %84 = vector.multi_reduction <add>, %83, %cst_27 [2] : vector<2x8x16xf32> to vector<2x8xf32>
    %85 = vector.shape_cast %84 : vector<2x8xf32> to vector<2x8x1xf32>
    %86 = tpu.reciprocal %85 {approx = true} : vector<2x8x1xf32> -> vector<2x8x1xf32>
    %87 = vector.broadcast %86 : vector<2x8x1xf32> to vector<2x8x16xf32>
    %88 = arith.mulf %83, %87 : vector<2x8x16xf32>
    "tpu.trace_start"() <{level = 10 : i32, message = "hqk,hkd->hqd"}> : () -> ()
    %cst_28 = arith.constant dense<0.000000e+00> : vector<2x8x8xf32>
    %89 = tpu.matmul %88, %55, %cst_28 {dimension_numbers = #tpu.dot_dimension_numbers<[2], [1], [1], [2], [0, 0, 0, 1, 1, 2], [0], [0]>} : vector<2x8x16xf32>, vector<2x16x8xf32>, vector<2x8x8xf32> -> vector<2x8x8xf32>
    %cst_29 = arith.constant 1.000000e+00 : f32
    "tpu.trace_stop"() : () -> ()
    %90 = vector.broadcast %cst_29 : f32 to vector<2x8x1xf32>
    %91 = tpu.concatenate %51, %90 in 2 : vector<2x8x8xf32>, vector<2x8x1xf32> -> vector<2x8x9xf32>
    %92 = vector.extract_strided_slice %56 {offsets = [0, 0, 8], sizes = [2, 8, 8], strides = [1, 1, 1]} : vector<2x8x16xf32> to vector<2x8x8xf32>
    %93 = tpu.iota {dimensions = array<i32: 1>} : vector<8x8xi32>
    %94 = tpu.iota {dimensions = array<i32: 0>} : vector<8x8xi32>
    %95 = arith.cmpi sle, %93, %94 : vector<8x8xi32>
    %96 = vector.shape_cast %95 : vector<8x8xi1> to vector<1x8x8xi1>
    %cst_30 = arith.constant 1.000000e+00 : f32
    %97 = vector.broadcast %cst_30 : f32 to vector<2x8x8xf32>
    %98 = arith.addf %97, %92 : vector<2x8x8xf32>
    %cst_31 = arith.constant 5.000000e-01 : f32
    %99 = vector.broadcast %cst_31 : f32 to vector<2x8x8xf32>
    %100 = arith.mulf %99, %92 : vector<2x8x8xf32>
    %101 = arith.mulf %100, %92 : vector<2x8x8xf32>
    %102 = arith.addf %98, %101 : vector<2x8x8xf32>
    %cst_32 = arith.constant 0.000000e+00 : f32
    %103 = vector.shape_cast %96 : vector<1x8x8xi1> to vector<1x8x8xi1>
    %104 = vector.broadcast %103 : vector<1x8x8xi1> to vector<2x8x8xi1>
    %105 = vector.broadcast %cst_32 : f32 to vector<2x8x8xf32>
    %106 = arith.select %104, %102, %105 : vector<2x8x8xi1>, vector<2x8x8xf32>
    %cst_33 = arith.constant 1.000000e+00 : f32
    %107 = vector.broadcast %cst_33 : f32 to vector<2x8x1xf32>
    %108 = vector.extract_strided_slice %39 {offsets = [0, 0, 0], sizes = [2, 8, 1], strides = [1, 1, 1]} : vector<2x8x8xf32> to vector<2x8x1xf32>
    %cst_34 = arith.constant 0.707106769 : f32
    %109 = vector.broadcast %cst_34 : f32 to vector<2x8x1xf32>
    %110 = arith.mulf %108, %109 : vector<2x8x1xf32>
    %111 = vector.broadcast %110 : vector<2x8x1xf32> to vector<2x8x8xf32>
    %112 = arith.mulf %39, %111 : vector<2x8x8xf32>
    %113 = vector.extract_strided_slice %39 {offsets = [0, 0, 1], sizes = [2, 8, 1], strides = [1, 1, 1]} : vector<2x8x8xf32> to vector<2x8x1xf32>
    %cst_35 = arith.constant 0.707106769 : f32
    %114 = vector.broadcast %cst_35 : f32 to vector<2x8x1xf32>
    %115 = arith.mulf %113, %114 : vector<2x8x1xf32>
    %116 = vector.broadcast %115 : vector<2x8x1xf32> to vector<2x8x8xf32>
    %117 = arith.mulf %39, %116 : vector<2x8x8xf32>
    %118 = vector.extract_strided_slice %39 {offsets = [0, 0, 2], sizes = [2, 8, 1], strides = [1, 1, 1]} : vector<2x8x8xf32> to vector<2x8x1xf32>
    %cst_36 = arith.constant 0.707106769 : f32
    %119 = vector.broadcast %cst_36 : f32 to vector<2x8x1xf32>
    %120 = arith.mulf %118, %119 : vector<2x8x1xf32>
    %121 = vector.broadcast %120 : vector<2x8x1xf32> to vector<2x8x8xf32>
    %122 = arith.mulf %39, %121 : vector<2x8x8xf32>
    %123 = vector.extract_strided_slice %39 {offsets = [0, 0, 3], sizes = [2, 8, 1], strides = [1, 1, 1]} : vector<2x8x8xf32> to vector<2x8x1xf32>
    %cst_37 = arith.constant 0.707106769 : f32
    %124 = vector.broadcast %cst_37 : f32 to vector<2x8x1xf32>
    %125 = arith.mulf %123, %124 : vector<2x8x1xf32>
    %126 = vector.broadcast %125 : vector<2x8x1xf32> to vector<2x8x8xf32>
    %127 = arith.mulf %39, %126 : vector<2x8x8xf32>
    %128 = vector.extract_strided_slice %39 {offsets = [0, 0, 4], sizes = [2, 8, 1], strides = [1, 1, 1]} : vector<2x8x8xf32> to vector<2x8x1xf32>
    %cst_38 = arith.constant 0.707106769 : f32
    %129 = vector.broadcast %cst_38 : f32 to vector<2x8x1xf32>
    %130 = arith.mulf %128, %129 : vector<2x8x1xf32>
    %131 = vector.broadcast %130 : vector<2x8x1xf32> to vector<2x8x8xf32>
    %132 = arith.mulf %39, %131 : vector<2x8x8xf32>
    %133 = vector.extract_strided_slice %39 {offsets = [0, 0, 5], sizes = [2, 8, 1], strides = [1, 1, 1]} : vector<2x8x8xf32> to vector<2x8x1xf32>
    %cst_39 = arith.constant 0.707106769 : f32
    %134 = vector.broadcast %cst_39 : f32 to vector<2x8x1xf32>
    %135 = arith.mulf %133, %134 : vector<2x8x1xf32>
    %136 = vector.broadcast %135 : vector<2x8x1xf32> to vector<2x8x8xf32>
    %137 = arith.mulf %39, %136 : vector<2x8x8xf32>
    %138 = vector.extract_strided_slice %39 {offsets = [0, 0, 6], sizes = [2, 8, 1], strides = [1, 1, 1]} : vector<2x8x8xf32> to vector<2x8x1xf32>
    %cst_40 = arith.constant 0.707106769 : f32
    %139 = vector.broadcast %cst_40 : f32 to vector<2x8x1xf32>
    %140 = arith.mulf %138, %139 : vector<2x8x1xf32>
    %141 = vector.broadcast %140 : vector<2x8x1xf32> to vector<2x8x8xf32>
    %142 = arith.mulf %39, %141 : vector<2x8x8xf32>
    %143 = vector.extract_strided_slice %39 {offsets = [0, 0, 7], sizes = [2, 8, 1], strides = [1, 1, 1]} : vector<2x8x8xf32> to vector<2x8x1xf32>
    %cst_41 = arith.constant 0.707106769 : f32
    %144 = vector.broadcast %cst_41 : f32 to vector<2x8x1xf32>
    %145 = arith.mulf %143, %144 : vector<2x8x1xf32>
    %146 = vector.broadcast %145 : vector<2x8x1xf32> to vector<2x8x8xf32>
    %147 = arith.mulf %39, %146 : vector<2x8x8xf32>
    %148 = tpu.concatenate %107, %39, %112, %117, %122, %127, %132, %137, %142, %147 in 2 : vector<2x8x1xf32>, vector<2x8x8xf32>, vector<2x8x8xf32>, vector<2x8x8xf32>, vector<2x8x8xf32>, vector<2x8x8xf32>, vector<2x8x8xf32>, vector<2x8x8xf32>, vector<2x8x8xf32>, vector<2x8x8xf32> -> vector<2x8x73xf32>
    "tpu.trace_start"() <{level = 10 : i32, message = "hqk,hkf->hqf"}> : () -> ()
    %cst_42 = arith.constant dense<0.000000e+00> : vector<2x8x9xf32>
    %149 = tpu.matmul %106, %91, %cst_42 {dimension_numbers = #tpu.dot_dimension_numbers<[2], [1], [1], [2], [0, 0, 0, 1, 1, 2], [0], [0]>} : vector<2x8x8xf32>, vector<2x8x9xf32>, vector<2x8x9xf32> -> vector<2x8x9xf32>
    "tpu.trace_stop"() : () -> ()
    %c0_43 = arith.constant 0 : index
    %c0_44 = arith.constant 0 : index
    %c0_45 = arith.constant 0 : index
    %150 = vector.load %arg14[%c0_43, %c0_44, %c0_45] : memref<2x73x9xf32, #tpu.memory_space<vmem>>, vector<2x73x9xf32>
    "tpu.trace_start"() <{level = 10 : i32, message = "hqt,htf->hqf"}> : () -> ()
    %cst_46 = arith.constant dense<0.000000e+00> : vector<2x8x9xf32>
    %151 = tpu.matmul %148, %150, %cst_46 {dimension_numbers = #tpu.dot_dimension_numbers<[2], [1], [1], [2], [0, 0, 0, 1, 1, 2], [0], [0]>} : vector<2x8x73xf32>, vector<2x73x9xf32>, vector<2x8x9xf32> -> vector<2x8x9xf32>
    "tpu.trace_stop"() : () -> ()
    %152 = arith.addf %149, %151 : vector<2x8x9xf32>
    %153 = vector.extract_strided_slice %152 {offsets = [0, 0, 0], sizes = [2, 8, 8], strides = [1, 1, 1]} : vector<2x8x9xf32> to vector<2x8x8xf32>
    %154 = vector.extract_strided_slice %152 {offsets = [0, 0, 8], sizes = [2, 8, 1], strides = [1, 1, 1]} : vector<2x8x9xf32> to vector<2x8x1xf32>
    %cst_47 = arith.constant 9.99999993E-9 : f32
    %155 = vector.broadcast %cst_47 : f32 to vector<2x8x1xf32>
    %156 = arith.addf %154, %155 : vector<2x8x1xf32>
    %157 = tpu.reciprocal %156 {approx = true} : vector<2x8x1xf32> -> vector<2x8x1xf32>
    %158 = vector.broadcast %157 : vector<2x8x1xf32> to vector<2x8x8xf32>
    %159 = arith.mulf %153, %158 : vector<2x8x8xf32>
    %160 = arith.addf %159, %89 : vector<2x8x8xf32>
    %161 = vector.extract_strided_slice %160 {offsets = [0, 0, 0], sizes = [1, 8, 8], strides = [1, 1, 1]} : vector<2x8x8xf32> to vector<1x8x8xf32>
    %162 = vector.shape_cast %161 : vector<1x8x8xf32> to vector<8x8xf32>
    %163 = vector.extract_strided_slice %160 {offsets = [1, 0, 0], sizes = [1, 8, 8], strides = [1, 1, 1]} : vector<2x8x8xf32> to vector<1x8x8xf32>
    %164 = vector.shape_cast %163 : vector<1x8x8xf32> to vector<8x8xf32>
    %165 = tpu.concatenate %162, %164 in 1 : vector<8x8xf32>, vector<8x8xf32> -> vector<8x16xf32>
    %166 = arith.addf %4, %165 : vector<8x16xf32>
    %c0_48 = arith.constant 0 : index
    %c0_49 = arith.constant 0 : index
    %167 = vector.load %arg7[%c0_48, %c0_49] : memref<1x16xf32, #tpu.memory_space<vmem>>, vector<1x16xf32>
    %c0_50 = arith.constant 0 : index
    %c0_51 = arith.constant 0 : index
    %168 = vector.load %arg8[%c0_50, %c0_51] : memref<1x16xf32, #tpu.memory_space<vmem>>, vector<1x16xf32>
    %cst_52 = arith.constant dense<0.000000e+00> : vector<8xf32>
    %169 = vector.multi_reduction <add>, %166, %cst_52 [1] : vector<8x16xf32> to vector<8xf32>
    %170 = vector.shape_cast %169 : vector<8xf32> to vector<8x1xf32>
    %cst_53 = arith.constant 1.600000e+01 : f32
    %171 = vector.broadcast %cst_53 : f32 to vector<8x1xf32>
    %172 = arith.divf %170, %171 : vector<8x1xf32>
    %173 = vector.broadcast %172 : vector<8x1xf32> to vector<8x16xf32>
    %174 = arith.subf %166, %173 : vector<8x16xf32>
    %175 = arith.mulf %174, %174 : vector<8x16xf32>
    %cst_54 = arith.constant dense<0.000000e+00> : vector<8xf32>
    %176 = vector.multi_reduction <add>, %175, %cst_54 [1] : vector<8x16xf32> to vector<8xf32>
    %177 = vector.shape_cast %176 : vector<8xf32> to vector<8x1xf32>
    %cst_55 = arith.constant 1.600000e+01 : f32
    %178 = vector.broadcast %cst_55 : f32 to vector<8x1xf32>
    %179 = arith.divf %177, %178 : vector<8x1xf32>
    %180 = vector.broadcast %172 : vector<8x1xf32> to vector<8x16xf32>
    %181 = arith.subf %166, %180 : vector<8x16xf32>
    %cst_56 = arith.constant 9.99999974E-6 : f32
    %182 = vector.broadcast %cst_56 : f32 to vector<8x1xf32>
    %183 = arith.addf %179, %182 : vector<8x1xf32>
    %184 = math.rsqrt %183 : vector<8x1xf32>
    %185 = vector.broadcast %184 : vector<8x1xf32> to vector<8x16xf32>
    %186 = arith.mulf %181, %185 : vector<8x16xf32>
    %187 = vector.broadcast %167 : vector<1x16xf32> to vector<8x16xf32>
    %188 = arith.mulf %186, %187 : vector<8x16xf32>
    %189 = vector.broadcast %168 : vector<1x16xf32> to vector<8x16xf32>
    %190 = arith.addf %188, %189 : vector<8x16xf32>
    %c0_57 = arith.constant 0 : index
    %c0_58 = arith.constant 0 : index
    %191 = vector.load %arg9[%c0_57, %c0_58] : memref<16x64xf32, #tpu.memory_space<vmem>>, vector<16x64xf32>
    %cst_59 = arith.constant dense<0.000000e+00> : vector<8x64xf32>
    %192 = tpu.matmul %190, %191, %cst_59 {dimension_numbers = #tpu.dot_dimension_numbers<[1], [0], [0], [1], [0, 0, 1, 1], [], []>} : vector<8x16xf32>, vector<16x64xf32>, vector<8x64xf32> -> vector<8x64xf32>
    %c0_60 = arith.constant 0 : index
    %c0_61 = arith.constant 0 : index
    %193 = vector.load %arg10[%c0_60, %c0_61] : memref<1x64xf32, #tpu.memory_space<vmem>>, vector<1x64xf32>
    %194 = vector.broadcast %193 : vector<1x64xf32> to vector<8x64xf32>
    %195 = arith.addf %192, %194 : vector<8x64xf32>
    %cst_62 = arith.constant 0.000000e+00 : f32
    %196 = vector.broadcast %cst_62 : f32 to vector<8x64xf32>
    %197 = arith.maximumf %195, %196 : vector<8x64xf32>
    %c0_63 = arith.constant 0 : index
    %c0_64 = arith.constant 0 : index
    %198 = vector.load %arg11[%c0_63, %c0_64] : memref<64x16xf32, #tpu.memory_space<vmem>>, vector<64x16xf32>
    %cst_65 = arith.constant dense<0.000000e+00> : vector<8x16xf32>
    %199 = tpu.matmul %197, %198, %cst_65 {dimension_numbers = #tpu.dot_dimension_numbers<[1], [0], [0], [1], [0, 0, 1, 1], [], []>} : vector<8x64xf32>, vector<64x16xf32>, vector<8x16xf32> -> vector<8x16xf32>
    %c0_66 = arith.constant 0 : index
    %c0_67 = arith.constant 0 : index
    %200 = vector.load %arg12[%c0_66, %c0_67] : memref<1x16xf32, #tpu.memory_space<vmem>>, vector<1x16xf32>
    %201 = vector.broadcast %200 : vector<1x16xf32> to vector<8x16xf32>
    %202 = arith.addf %199, %201 : vector<8x16xf32>
    %203 = arith.addf %166, %202 : vector<8x16xf32>
    %c0_68 = arith.constant 0 : index
    %c0_69 = arith.constant 0 : index
    %c0_70 = arith.constant 0 : index
    %204 = vector.load %arg13[%c0_68, %c0_69, %c0_70] : memref<1x8x16xf32, #tpu.memory_space<vmem>>, vector<1x8x16xf32>
    %205 = vector.shape_cast %204 : vector<1x8x16xf32> to vector<8x16xf32>
    %206 = vector.shape_cast %203 : vector<8x16xf32> to vector<1x8x16xf32>
    tpu.vector_store %arg13[%c0_68, %c0_69, %c0_70], %206 {strides = array<i32>} : memref<1x8x16xf32, #tpu.memory_space<vmem>>, vector<1x8x16xf32>,
    %c1_i32_71 = arith.constant 1 : i32
    %207 = arith.cmpi ne, %arg1, %c1_i32_71 : i32
    %208 = arith.extui %207 : i1 to i32
    %c0_i32_72 = arith.constant 0 : i32
    %209 = arith.cmpi ne, %208, %c0_i32_72 : i32
    scf.if %209 {
      %cst_73 = arith.constant 1.000000e+00 : f32
      %210 = vector.broadcast %cst_73 : f32 to vector<2x8x1xf32>
      %211 = vector.extract_strided_slice %45 {offsets = [0, 0, 0], sizes = [2, 8, 1], strides = [1, 1, 1]} : vector<2x8x8xf32> to vector<2x8x1xf32>
      %cst_74 = arith.constant 0.707106769 : f32
      %212 = vector.broadcast %cst_74 : f32 to vector<2x8x1xf32>
      %213 = arith.mulf %211, %212 : vector<2x8x1xf32>
      %214 = vector.broadcast %213 : vector<2x8x1xf32> to vector<2x8x8xf32>
      %215 = arith.mulf %45, %214 : vector<2x8x8xf32>
      %216 = vector.extract_strided_slice %45 {offsets = [0, 0, 1], sizes = [2, 8, 1], strides = [1, 1, 1]} : vector<2x8x8xf32> to vector<2x8x1xf32>
      %cst_75 = arith.constant 0.707106769 : f32
      %217 = vector.broadcast %cst_75 : f32 to vector<2x8x1xf32>
      %218 = arith.mulf %216, %217 : vector<2x8x1xf32>
      %219 = vector.broadcast %218 : vector<2x8x1xf32> to vector<2x8x8xf32>
      %220 = arith.mulf %45, %219 : vector<2x8x8xf32>
      %221 = vector.extract_strided_slice %45 {offsets = [0, 0, 2], sizes = [2, 8, 1], strides = [1, 1, 1]} : vector<2x8x8xf32> to vector<2x8x1xf32>
      %cst_76 = arith.constant 0.707106769 : f32
      %222 = vector.broadcast %cst_76 : f32 to vector<2x8x1xf32>
      %223 = arith.mulf %221, %222 : vector<2x8x1xf32>
      %224 = vector.broadcast %223 : vector<2x8x1xf32> to vector<2x8x8xf32>
      %225 = arith.mulf %45, %224 : vector<2x8x8xf32>
      %226 = vector.extract_strided_slice %45 {offsets = [0, 0, 3], sizes = [2, 8, 1], strides = [1, 1, 1]} : vector<2x8x8xf32> to vector<2x8x1xf32>
      %cst_77 = arith.constant 0.707106769 : f32
      %227 = vector.broadcast %cst_77 : f32 to vector<2x8x1xf32>
      %228 = arith.mulf %226, %227 : vector<2x8x1xf32>
      %229 = vector.broadcast %228 : vector<2x8x1xf32> to vector<2x8x8xf32>
      %230 = arith.mulf %45, %229 : vector<2x8x8xf32>
      %231 = vector.extract_strided_slice %45 {offsets = [0, 0, 4], sizes = [2, 8, 1], strides = [1, 1, 1]} : vector<2x8x8xf32> to vector<2x8x1xf32>
      %cst_78 = arith.constant 0.707106769 : f32
      %232 = vector.broadcast %cst_78 : f32 to vector<2x8x1xf32>
      %233 = arith.mulf %231, %232 : vector<2x8x1xf32>
      %234 = vector.broadcast %233 : vector<2x8x1xf32> to vector<2x8x8xf32>
      %235 = arith.mulf %45, %234 : vector<2x8x8xf32>
      %236 = vector.extract_strided_slice %45 {offsets = [0, 0, 5], sizes = [2, 8, 1], strides = [1, 1, 1]} : vector<2x8x8xf32> to vector<2x8x1xf32>
      %cst_79 = arith.constant 0.707106769 : f32
      %237 = vector.broadcast %cst_79 : f32 to vector<2x8x1xf32>
      %238 = arith.mulf %236, %237 : vector<2x8x1xf32>
      %239 = vector.broadcast %238 : vector<2x8x1xf32> to vector<2x8x8xf32>
      %240 = arith.mulf %45, %239 : vector<2x8x8xf32>
      %241 = vector.extract_strided_slice %45 {offsets = [0, 0, 6], sizes = [2, 8, 1], strides = [1, 1, 1]} : vector<2x8x8xf32> to vector<2x8x1xf32>
      %cst_80 = arith.constant 0.707106769 : f32
      %242 = vector.broadcast %cst_80 : f32 to vector<2x8x1xf32>
      %243 = arith.mulf %241, %242 : vector<2x8x1xf32>
      %244 = vector.broadcast %243 : vector<2x8x1xf32> to vector<2x8x8xf32>
      %245 = arith.mulf %45, %244 : vector<2x8x8xf32>
      %246 = vector.extract_strided_slice %45 {offsets = [0, 0, 7], sizes = [2, 8, 1], strides = [1, 1, 1]} : vector<2x8x8xf32> to vector<2x8x1xf32>
      %cst_81 = arith.constant 0.707106769 : f32
      %247 = vector.broadcast %cst_81 : f32 to vector<2x8x1xf32>
      %248 = arith.mulf %246, %247 : vector<2x8x1xf32>
      %249 = vector.broadcast %248 : vector<2x8x1xf32> to vector<2x8x8xf32>
      %250 = arith.mulf %45, %249 : vector<2x8x8xf32>
      %251 = tpu.concatenate %210, %45, %215, %220, %225, %230, %235, %240, %245, %250 in 2 : vector<2x8x1xf32>, vector<2x8x8xf32>, vector<2x8x8xf32>, vector<2x8x8xf32>, vector<2x8x8xf32>, vector<2x8x8xf32>, vector<2x8x8xf32>, vector<2x8x8xf32>, vector<2x8x8xf32>, vector<2x8x8xf32> -> vector<2x8x73xf32>
      %c0_82 = arith.constant 0 : index
      %c0_83 = arith.constant 0 : index
      %c0_84 = arith.constant 0 : index
      %252 = vector.load %arg14[%c0_82, %c0_83, %c0_84] : memref<2x73x9xf32, #tpu.memory_space<vmem>>, vector<2x73x9xf32>
      "tpu.trace_start"() <{level = 10 : i32, message = "hkt,hkf->htf"}> : () -> ()
      %cst_85 = arith.constant dense<0.000000e+00> : vector<2x73x9xf32>
      %253 = tpu.matmul %251, %91, %cst_85 {dimension_numbers = #tpu.dot_dimension_numbers<[1], [1], [2], [2], [0, 0, 0, 2, 1, 2], [0], [0]>} : vector<2x8x73xf32>, vector<2x8x9xf32>, vector<2x73x9xf32> -> vector<2x73x9xf32>
      "tpu.trace_stop"() : () -> ()
      %254 = arith.addf %252, %253 : vector<2x73x9xf32>
      %c0_86 = arith.constant 0 : index
      %c0_87 = arith.constant 0 : index
      %c0_88 = arith.constant 0 : index
      %255 = vector.load %arg14[%c0_86, %c0_87, %c0_88] : memref<2x73x9xf32, #tpu.memory_space<vmem>>, vector<2x73x9xf32>
      tpu.vector_store %arg14[%c0_86, %c0_87, %c0_88], %254 {strides = array<i32>} : memref<2x73x9xf32, #tpu.memory_space<vmem>>, vector<2x73x9xf32>,
      %c0_89 = arith.constant 0 : index
      %c0_90 = arith.constant 0 : index
      %c0_91 = arith.constant 0 : index
      %256 = vector.load %arg15[%c0_89, %c0_90, %c0_91] : memref<2x8x8xf32, #tpu.memory_space<vmem>>, vector<2x8x8xf32>
      tpu.vector_store %arg15[%c0_89, %c0_90, %c0_91], %45 {strides = array<i32>} : memref<2x8x8xf32, #tpu.memory_space<vmem>>, vector<2x8x8xf32>,
      %c0_92 = arith.constant 0 : index
      %c0_93 = arith.constant 0 : index
      %c0_94 = arith.constant 0 : index
      %257 = vector.load %arg16[%c0_92, %c0_93, %c0_94] : memref<2x8x8xf32, #tpu.memory_space<vmem>>, vector<2x8x8xf32>
      tpu.vector_store %arg16[%c0_92, %c0_93, %c0_94], %51 {strides = array<i32>} : memref<2x8x8xf32, #tpu.memory_space<vmem>>, vector<2x8x8xf32>,
    } else {
    }
    return
  }
  func.func @transform_0(%arg0: i32, %arg1: i32) -> (i32, i32, i32) {
    %c0_i32 = arith.constant 0 : i32
    %c0_i32_0 = arith.constant 0 : i32
    return %arg0, %arg1, %c0_i32 : i32, i32, i32
  }
  func.func @transform_1(%arg0: i32, %arg1: i32) -> (i32, i32) {
    %c0_i32 = arith.constant 0 : i32
    %c0_i32_0 = arith.constant 0 : i32
    %c0_i32_1 = arith.constant 0 : i32
    return %c0_i32, %c0_i32_0 : i32, i32
  }
  func.func @transform_2(%arg0: i32, %arg1: i32) -> (i32, i32) {
    %c0_i32 = arith.constant 0 : i32
    %c0_i32_0 = arith.constant 0 : i32
    %c0_i32_1 = arith.constant 0 : i32
    return %c0_i32, %c0_i32_0 : i32, i32
  }
  func.func @transform_3(%arg0: i32, %arg1: i32) -> (i32, i32) {
    %c0_i32 = arith.constant 0 : i32
    %c0_i32_0 = arith.constant 0 : i32
    %c0_i32_1 = arith.constant 0 : i32
    return %c0_i32, %c0_i32_0 : i32, i32
  }
  func.func @transform_4(%arg0: i32, %arg1: i32) -> (i32, i32) {
    %c0_i32 = arith.constant 0 : i32
    %c0_i32_0 = arith.constant 0 : i32
    %c0_i32_1 = arith.constant 0 : i32
    return %c0_i32, %c0_i32_0 : i32, i32
  }
  func.func @transform_5(%arg0: i32, %arg1: i32) -> (i32, i32) {
    %c0_i32 = arith.constant 0 : i32
    %c0_i32_0 = arith.constant 0 : i32
    %c0_i32_1 = arith.constant 0 : i32
    return %c0_i32, %c0_i32_0 : i32, i32
  }
  func.func @transform_6(%arg0: i32, %arg1: i32) -> (i32, i32) {
    %c0_i32 = arith.constant 0 : i32
    %c0_i32_0 = arith.constant 0 : i32
    %c0_i32_1 = arith.constant 0 : i32
    return %c0_i32, %c0_i32_0 : i32, i32
  }
  func.func @transform_7(%arg0: i32, %arg1: i32) -> (i32, i32) {
    %c0_i32 = arith.constant 0 : i32
    %c0_i32_0 = arith.constant 0 : i32
    %c0_i32_1 = arith.constant 0 : i32
    return %c0_i32, %c0_i32_0 : i32, i32
  }
  func.func @transform_8(%arg0: i32, %arg1: i32) -> (i32, i32) {
    %c0_i32 = arith.constant 0 : i32
    %c0_i32_0 = arith.constant 0 : i32
    %c0_i32_1 = arith.constant 0 : i32
    return %c0_i32, %c0_i32_0 : i32, i32
  }
  func.func @transform_9(%arg0: i32, %arg1: i32) -> (i32, i32) {
    %c0_i32 = arith.constant 0 : i32
    %c0_i32_0 = arith.constant 0 : i32
    %c0_i32_1 = arith.constant 0 : i32
    return %c0_i32, %c0_i32_0 : i32, i32
  }
  func.func @transform_10(%arg0: i32, %arg1: i32) -> (i32, i32) {
    %c0_i32 = arith.constant 0 : i32
    %c0_i32_0 = arith.constant 0 : i32
    %c0_i32_1 = arith.constant 0 : i32
    return %c0_i32, %c0_i32_0 : i32, i32
  }
  func.func @transform_11(%arg0: i32, %arg1: i32) -> (i32, i32, i32) {
    %c0_i32 = arith.constant 0 : i32
    %c0_i32_0 = arith.constant 0 : i32
    return %arg0, %arg1, %c0_i32 : i32, i32, i32
  }
}

</mosaic_0001>

<llo_original>
// kernel: tpu_custom_call.1
$region0: #{tpu_custom_call.1}
  #allocation0 [shape = 'u32[]', space=smem, size = 0x4, offset = 0x4, fixed_abs, tag = 'smem constant byte address 0x4 - core index']
  #allocation1 [shape = 'u32[144,128]{1,0:T(1,128)}', space=vmem, size = 0x12000, scoped, tag = 'internal scratch']
  #allocation2 [shape = 'f32[2,73,9]{2,1,0:T(8,128)}', space=vmem, size = 0x14000, scoped, tag = 'scratch operand']
  #allocation3 [shape = 'f32[2,8,8]{2,1,0:T(8,128)}', space=vmem, size = 0x2000, scoped, tag = 'scratch operand']
  #allocation4 [shape = 'f32[2,8,8]{2,1,0:T(8,128)}', space=vmem, size = 0x2000, scoped, tag = 'scratch operand']
  %s0 = inlined_call_operand.vmem [shape: f32[2,16,16], index: 0, kind: input, shape index: {}]
  %s1 = inlined_call_operand.vmem [shape: f32[16,48], index: 1, kind: input, shape index: {}]
  %s2 = inlined_call_operand.vmem [shape: f32[1,48], index: 2, kind: input, shape index: {}]
  %s3 = inlined_call_operand.vmem [shape: f32[1,16], index: 3, kind: input, shape index: {}]
  %s4 = inlined_call_operand.vmem [shape: f32[1,16], index: 4, kind: input, shape index: {}]
  %s5 = inlined_call_operand.vmem [shape: f32[1,16], index: 5, kind: input, shape index: {}]
  %s6 = inlined_call_operand.vmem [shape: f32[1,16], index: 6, kind: input, shape index: {}]
  %s7 = inlined_call_operand.vmem [shape: f32[16,64], index: 7, kind: input, shape index: {}]
  %s8 = inlined_call_operand.vmem [shape: f32[1,64], index: 8, kind: input, shape index: {}]
  %s9 = inlined_call_operand.vmem [shape: f32[64,16], index: 9, kind: input, shape index: {}]
  %s10 = inlined_call_operand.vmem [shape: f32[1,16], index: 10, kind: input, shape index: {}]
  %s11 = inlined_call_operand.hbm [shape: f32[2,16,16], index: 11, kind: output, shape index: {}]
  %s12 = sld [smem:[#allocation0]]
  $region85: #{tpu_custom_call.1} parent=0
    _
  %s14 = ssub.s32 1, %s12
  %s15 = scalar_select 0, %s14, %s12
  $region1: #{tpu_custom_call.1} parent=0
    #allocation5 [shape = 'u8[8192]{0}', space=vmem, size = 0x2000, scoped, tag = 'output window, operand 0']
    #allocation6 [shape = 's32[2]{0}', space=sflag, size = 0x8, scoped, tag = 'scoped memory for tpu_custom_call.1']
    %16 = vsyncpa [#allocation6], 0
    %s17 = scalar_lea.sflag [#allocation6], 1
    %18 = vsyncpa %s17, 0
    loop: start=0, step=1, limit=6
    $region2: #{tpu_custom_call.1} parent=1 // loop_pre_header
      _
    $region3: #{tpu_custom_call.1} parent=1 // loop_header
      %s20 = sphi 0, %s24
      %p21 = scmp.ge.s32.totalorder %s20, 6
      %s27 = sphi 0, %s39
      %s28 = sphi 0, %s35
      %s29 = sphi 0, %s27
      %s30 = sphi 0, %s28
      %s31 = sphi 0, %s29
      %s32 = sphi 0, %s30
      %s44 = sphi 0, %s46
      %s47 = sphi 0, %s44
      %s48 = sphi 0, %s47
      %s64 = sphi 0, %s48
      %s68 = sphi 0, %s68
      %s70 = sphi 0, %s68
      %s71 = sphi 0, %s70
      %s85 = sphi 0, %s71
      %s89 = sphi 0, %s89
      %s91 = sphi 0, %s89
      %s92 = sphi 0, %s91
      %s106 = sphi 0, %s92
      %s110 = sphi 0, %s110
      %s112 = sphi 0, %s110
      %s113 = sphi 0, %s112
      %s127 = sphi 0, %s113
      %s131 = sphi 0, %s131
      %s133 = sphi 0, %s131
      %s134 = sphi 0, %s133
      %s148 = sphi 0, %s134
      %s152 = sphi 0, %s152
      %s154 = sphi 0, %s152
      %s155 = sphi 0, %s154
      %s169 = sphi 0, %s155
      %s173 = sphi 0, %s173
      %s175 = sphi 0, %s173
      %s176 = sphi 0, %s175
      %s190 = sphi 0, %s176
      %s194 = sphi 0, %s194
      %s196 = sphi 0, %s194
      %s197 = sphi 0, %s196
      %s211 = sphi 0, %s197
      %s215 = sphi 0, %s215
      %s217 = sphi 0, %s215
      %s218 = sphi 0, %s217
      %s232 = sphi 0, %s218
      %s236 = sphi 0, %s236
      %s238 = sphi 0, %s236
      %s239 = sphi 0, %s238
      %s253 = sphi 0, %s239
      %s257 = sphi 0, %s257
      %s259 = sphi 0, %s257
      %s260 = sphi 0, %s259
      %s274 = sphi 0, %s260
      %s282 = sphi 0, %s284
      %s285 = sphi 0, %s282
      %s286 = sphi 0, %s285
      %s302 = sphi 0, %s286
    $region4: #{tpu_custom_call.1} parent=1 // loop_header_branch
      %23 = sbr.rel (%p21) target = $region8
    $region5: #{tpu_custom_call.1} parent=1 // loop_body
      %s25 = ssub.s32 %s20, 1
      %s26 = ssub.s32 %s20, 2
      %s33 = sadd.s32 1, %s28
      %p34 = scmp.ge.s32.totalorder %s33, 2
      %s35 = scalar_select %p34, 0, %s33
      %s36 = sadd.s32 1, %s27
      %s37 = scalar_select %p34, %s36, %s27
      %p38 = scmp.ge.s32.totalorder %s37, 2
      %s39 = scalar_select %p38, 0, %s37
      %s40 = ssub.s32 %s27, %s39
      %s41 = ssub.s32 %s28, %s35
      %s42 = sor.u32 %s40, %s41
      %p43 = scmp.eq.s32.totalorder %s42, 0
      %s45 = sadd.s32 %s44, 1
      %s46 = scalar_select %p43, %s44, %s45
      %p49 = pneg %p43
      %p50 = scmp.eq.s32.totalorder %s20, 3
      %p51 = por %p49, %p50
      %p52 = scmp.ne.s32.totalorder %s44, %s47
      %p53 = scmp.eq.s32.totalorder %s20, 0
      %p54 = por %p52, %p53
      %p55 = scmp.ne.s32.totalorder %s44, %s47
      %p56 = scmp.eq.s32.totalorder %s25, 3
      %p57 = por %p55, %p56
      %p58 = scmp.ne.s32.totalorder %s47, %s48
      %p59 = scmp.eq.s32.totalorder %s25, 0
      %p60 = por %p58, %p59
      %p61 = scmp.ne.s32.totalorder %s47, %s48
      %p62 = scmp.eq.s32.totalorder %s26, 3
      %p63 = por %p61, %p62
      %p65 = scmp.ne.s32.totalorder %s48, %s64
      %p66 = scmp.eq.s32.totalorder %s26, 0
      %p67 = por %p65, %p66
      %s69 = sadd.s32 %s68, 1
      %p72 = scmp.eq.s32.totalorder %s20, 3
      %p73 = scmp.ne.s32.totalorder %s68, %s70
      %p74 = scmp.eq.s32.totalorder %s20, 0
      %p75 = por %p73, %p74
      %p76 = scmp.ne.s32.totalorder %s68, %s70
      %p77 = scmp.eq.s32.totalorder %s25, 3
      %p78 = por %p76, %p77
      %p79 = scmp.ne.s32.totalorder %s70, %s71
      %p80 = scmp.eq.s32.totalorder %s25, 0
      %p81 = por %p79, %p80
      %p82 = scmp.ne.s32.totalorder %s70, %s71
      %p83 = scmp.eq.s32.totalorder %s26, 3
      %p84 = por %p82, %p83
      %p86 = scmp.ne.s32.totalorder %s71, %s85
      %p87 = scmp.eq.s32.totalorder %s26, 0
      %p88 = por %p86, %p87
      %s90 = sadd.s32 %s89, 1
      %p93 = scmp.eq.s32.totalorder %s20, 3
      %p94 = scmp.ne.s32.totalorder %s89, %s91
      %p95 = scmp.eq.s32.totalorder %s20, 0
      %p96 = por %p94, %p95
      %p97 = scmp.ne.s32.totalorder %s89, %s91
      %p98 = scmp.eq.s32.totalorder %s25, 3
      %p99 = por %p97, %p98
      %p100 = scmp.ne.s32.totalorder %s91, %s92
      %p101 = scmp.eq.s32.totalorder %s25, 0
      %p102 = por %p100, %p101
      %p103 = scmp.ne.s32.totalorder %s91, %s92
      %p104 = scmp.eq.s32.totalorder %s26, 3
      %p105 = por %p103, %p104
      %p107 = scmp.ne.s32.totalorder %s92, %s106
      %p108 = scmp.eq.s32.totalorder %s26, 0
      %p109 = por %p107, %p108
      %s111 = sadd.s32 %s110, 1
      %p114 = scmp.eq.s32.totalorder %s20, 3
      %p115 = scmp.ne.s32.totalorder %s110, %s112
      %p116 = scmp.eq.s32.totalorder %s20, 0
      %p117 = por %p115, %p116
      %p118 = scmp.ne.s32.totalorder %s110, %s112
      %p119 = scmp.eq.s32.totalorder %s25, 3
      %p120 = por %p118, %p119
      %p121 = scmp.ne.s32.totalorder %s112, %s113
      %p122 = scmp.eq.s32.totalorder %s25, 0
      %p123 = por %p121, %p122
      %p124 = scmp.ne.s32.totalorder %s112, %s113
      %p125 = scmp.eq.s32.totalorder %s26, 3
      %p126 = por %p124, %p125
      %p128 = scmp.ne.s32.totalorder %s113, %s127
      %p129 = scmp.eq.s32.totalorder %s26, 0
      %p130 = por %p128, %p129
      %s132 = sadd.s32 %s131, 1
      %p135 = scmp.eq.s32.totalorder %s20, 3
      %p136 = scmp.ne.s32.totalorder %s131, %s133
      %p137 = scmp.eq.s32.totalorder %s20, 0
      %p138 = por %p136, %p137
      %p139 = scmp.ne.s32.totalorder %s131, %s133
      %p140 = scmp.eq.s32.totalorder %s25, 3
      %p141 = por %p139, %p140
      %p142 = scmp.ne.s32.totalorder %s133, %s134
      %p143 = scmp.eq.s32.totalorder %s25, 0
      %p144 = por %p142, %p143
      %p145 = scmp.ne.s32.totalorder %s133, %s134
      %p146 = scmp.eq.s32.totalorder %s26, 3
      %p147 = por %p145, %p146
      %p149 = scmp.ne.s32.totalorder %s134, %s148
      %p150 = scmp.eq.s32.totalorder %s26, 0
      %p151 = por %p149, %p150
      %s153 = sadd.s32 %s152, 1
      %p156 = scmp.eq.s32.totalorder %s20, 3
      %p157 = scmp.ne.s32.totalorder %s152, %s154
      %p158 = scmp.eq.s32.totalorder %s20, 0
      %p159 = por %p157, %p158
      %p160 = scmp.ne.s32.totalorder %s152, %s154
      %p161 = scmp.eq.s32.totalorder %s25, 3
      %p162 = por %p160, %p161
      %p163 = scmp.ne.s32.totalorder %s154, %s155
      %p164 = scmp.eq.s32.totalorder %s25, 0
      %p165 = por %p163, %p164
      %p166 = scmp.ne.s32.totalorder %s154, %s155
      %p167 = scmp.eq.s32.totalorder %s26, 3
      %p168 = por %p166, %p167
      %p170 = scmp.ne.s32.totalorder %s155, %s169
      %p171 = scmp.eq.s32.totalorder %s26, 0
      %p172 = por %p170, %p171
      %s174 = sadd.s32 %s173, 1
      %p177 = scmp.eq.s32.totalorder %s20, 3
      %p178 = scmp.ne.s32.totalorder %s173, %s175
      %p179 = scmp.eq.s32.totalorder %s20, 0
      %p180 = por %p178, %p179
      %p181 = scmp.ne.s32.totalorder %s173, %s175
      %p182 = scmp.eq.s32.totalorder %s25, 3
      %p183 = por %p181, %p182
      %p184 = scmp.ne.s32.totalorder %s175, %s176
      %p185 = scmp.eq.s32.totalorder %s25, 0
      %p186 = por %p184, %p185
      %p187 = scmp.ne.s32.totalorder %s175, %s176
      %p188 = scmp.eq.s32.totalorder %s26, 3
      %p189 = por %p187, %p188
      %p191 = scmp.ne.s32.totalorder %s176, %s190
      %p192 = scmp.eq.s32.totalorder %s26, 0
      %p193 = por %p191, %p192
      %s195 = sadd.s32 %s194, 1
      %p198 = scmp.eq.s32.totalorder %s20, 3
      %p199 = scmp.ne.s32.totalorder %s194, %s196
      %p200 = scmp.eq.s32.totalorder %s20, 0
      %p201 = por %p199, %p200
      %p202 = scmp.ne.s32.totalorder %s194, %s196
      %p203 = scmp.eq.s32.totalorder %s25, 3
      %p204 = por %p202, %p203
      %p205 = scmp.ne.s32.totalorder %s196, %s197
      %p206 = scmp.eq.s32.totalorder %s25, 0
      %p207 = por %p205, %p206
      %p208 = scmp.ne.s32.totalorder %s196, %s197
      %p209 = scmp.eq.s32.totalorder %s26, 3
      %p210 = por %p208, %p209
      %p212 = scmp.ne.s32.totalorder %s197, %s211
      %p213 = scmp.eq.s32.totalorder %s26, 0
      %p214 = por %p212, %p213
      %s216 = sadd.s32 %s215, 1
      %p219 = scmp.eq.s32.totalorder %s20, 3
      %p220 = scmp.ne.s32.totalorder %s215, %s217
      %p221 = scmp.eq.s32.totalorder %s20, 0
      %p222 = por %p220, %p221
      %p223 = scmp.ne.s32.totalorder %s215, %s217
      %p224 = scmp.eq.s32.totalorder %s25, 3
      %p225 = por %p223, %p224
      %p226 = scmp.ne.s32.totalorder %s217, %s218
      %p227 = scmp.eq.s32.totalorder %s25, 0
      %p228 = por %p226, %p227
      %p229 = scmp.ne.s32.totalorder %s217, %s218
      %p230 = scmp.eq.s32.totalorder %s26, 3
      %p231 = por %p229, %p230
      %p233 = scmp.ne.s32.totalorder %s218, %s232
      %p234 = scmp.eq.s32.totalorder %s26, 0
      %p235 = por %p233, %p234
      %s237 = sadd.s32 %s236, 1
      %p240 = scmp.eq.s32.totalorder %s20, 3
      %p241 = scmp.ne.s32.totalorder %s236, %s238
      %p242 = scmp.eq.s32.totalorder %s20, 0
      %p243 = por %p241, %p242
      %p244 = scmp.ne.s32.totalorder %s236, %s238
      %p245 = scmp.eq.s32.totalorder %s25, 3
      %p246 = por %p244, %p245
      %p247 = scmp.ne.s32.totalorder %s238, %s239
      %p248 = scmp.eq.s32.totalorder %s25, 0
      %p249 = por %p247, %p248
      %p250 = scmp.ne.s32.totalorder %s238, %s239
      %p251 = scmp.eq.s32.totalorder %s26, 3
      %p252 = por %p250, %p251
      %p254 = scmp.ne.s32.totalorder %s239, %s253
      %p255 = scmp.eq.s32.totalorder %s26, 0
      %p256 = por %p254, %p255
      %s258 = sadd.s32 %s257, 1
      %p261 = scmp.eq.s32.totalorder %s20, 3
      %p262 = scmp.ne.s32.totalorder %s257, %s259
      %p263 = scmp.eq.s32.totalorder %s20, 0
      %p264 = por %p262, %p263
      %p265 = scmp.ne.s32.totalorder %s257, %s259
      %p266 = scmp.eq.s32.totalorder %s25, 3
      %p267 = por %p265, %p266
      %p268 = scmp.ne.s32.totalorder %s259, %s260
      %p269 = scmp.eq.s32.totalorder %s25, 0
      %p270 = por %p268, %p269
      %p271 = scmp.ne.s32.totalorder %s259, %s260
      %p272 = scmp.eq.s32.totalorder %s26, 3
      %p273 = por %p271, %p272
      %p275 = scmp.ne.s32.totalorder %s260, %s274
      %p276 = scmp.eq.s32.totalorder %s26, 0
      %p277 = por %p275, %p276
      %s278 = ssub.s32 %s27, %s39
      %s279 = ssub.s32 %s28, %s35
      %s280 = sor.u32 %s278, %s279
      %p281 = scmp.eq.s32.totalorder %s280, 0
      %s283 = sadd.s32 %s282, 1
      %s284 = scalar_select %p281, %s282, %s283
      %p287 = pneg %p281
      %p288 = scmp.eq.s32.totalorder %s20, 3
      %p289 = por %p287, %p288
      %p290 = scmp.ne.s32.totalorder %s282, %s285
      %p291 = scmp.eq.s32.totalorder %s20, 0
      %p292 = por %p290, %p291
      %p293 = scmp.ne.s32.totalorder %s282, %s285
      %p294 = scmp.eq.s32.totalorder %s25, 3
      %p295 = por %p293, %p294
      %p296 = scmp.ne.s32.totalorder %s285, %s286
      %p297 = scmp.eq.s32.totalorder %s25, 0
      %p298 = por %p296, %p297
      %p299 = scmp.ne.s32.totalorder %s285, %s286
      %p300 = scmp.eq.s32.totalorder %s26, 3
      %p301 = por %p299, %p300
      %p303 = scmp.ne.s32.totalorder %s286, %s302
      %p304 = scmp.eq.s32.totalorder %s26, 0
      %p305 = por %p303, %p304
      %p306 = scmp.le.s32.totalorder 1, %s20
      %p307 = scmp.lt.s32.totalorder %s20, 5
      %p308 = pnand %p306, %p307
      %p309 = pneg %p308
      // Predicated region
      $region9: #{tpu_custom_call.1} parent=5 // pred_check
        _
      $region10: #{tpu_custom_call.1} parent=5 // pred_check_branch
        %311 = sbr.rel (%p308) target = $region12
      $region11: #{tpu_custom_call.1} parent=5 // pred_region
        %s312 = ssub.s32 %s20, 1
        // Predicated region
        $region13: #{tpu_custom_call.1} parent=11 // pred_check
          %p313 = pneg %p81
        $region14: #{tpu_custom_call.1} parent=11 // pred_check_branch
          %315 = sbr.rel (%p313) target = $region16
        $region15: #{tpu_custom_call.1} parent=11 // pred_region
          _
        $region16: #{tpu_custom_call.1} parent=11 // pred_fallthru
          _
        // Predicated region
        $region17: #{tpu_custom_call.1} parent=11 // pred_check
          %p316 = pneg %p102
        $region18: #{tpu_custom_call.1} parent=11 // pred_check_branch
          %318 = sbr.rel (%p316) target = $region20
        $region19: #{tpu_custom_call.1} parent=11 // pred_region
          _
        $region20: #{tpu_custom_call.1} parent=11 // pred_fallthru
          _
        // Predicated region
        $region21: #{tpu_custom_call.1} parent=11 // pred_check
          %p319 = pneg %p123
        $region22: #{tpu_custom_call.1} parent=11 // pred_check_branch
          %321 = sbr.rel (%p319) target = $region24
        $region23: #{tpu_custom_call.1} parent=11 // pred_region
          _
        $region24: #{tpu_custom_call.1} parent=11 // pred_fallthru
          _
        // Predicated region
        $region25: #{tpu_custom_call.1} parent=11 // pred_check
          %p322 = pneg %p144
        $region26: #{tpu_custom_call.1} parent=11 // pred_check_branch
          %324 = sbr.rel (%p322) target = $region28
        $region27: #{tpu_custom_call.1} parent=11 // pred_region
          _
        $region28: #{tpu_custom_call.1} parent=11 // pred_fallthru
          _
        // Predicated region
        $region29: #{tpu_custom_call.1} parent=11 // pred_check
          %p325 = pneg %p165
        $region30: #{tpu_custom_call.1} parent=11 // pred_check_branch
          %327 = sbr.rel (%p325) target = $region32
        $region31: #{tpu_custom_call.1} parent=11 // pred_region
          _
        $region32: #{tpu_custom_call.1} parent=11 // pred_fallthru
          _
        // Predicated region
        $region33: #{tpu_custom_call.1} parent=11 // pred_check
          %p328 = pneg %p186
        $region34: #{tpu_custom_call.1} parent=11 // pred_check_branch
          %330 = sbr.rel (%p328) target = $region36
        $region35: #{tpu_custom_call.1} parent=11 // pred_region
          _
        $region36: #{tpu_custom_call.1} parent=11 // pred_fallthru
          _
        // Predicated region
        $region37: #{tpu_custom_call.1} parent=11 // pred_check
          %p331 = pneg %p207
        $region38: #{tpu_custom_call.1} parent=11 // pred_check_branch
          %333 = sbr.rel (%p331) target = $region40
        $region39: #{tpu_custom_call.1} parent=11 // pred_region
          _
        $region40: #{tpu_custom_call.1} parent=11 // pred_fallthru
          _
        // Predicated region
        $region41: #{tpu_custom_call.1} parent=11 // pred_check
          %p334 = pneg %p228
        $region42: #{tpu_custom_call.1} parent=11 // pred_check_branch
          %336 = sbr.rel (%p334) target = $region44
        $region43: #{tpu_custom_call.1} parent=11 // pred_region
          _
        $region44: #{tpu_custom_call.1} parent=11 // pred_fallthru
          _
        // Predicated region
        $region45: #{tpu_custom_call.1} parent=11 // pred_check
          %p337 = pneg %p249
        $region46: #{tpu_custom_call.1} parent=11 // pred_check_branch
          %339 = sbr.rel (%p337) target = $region48
        $region47: #{tpu_custom_call.1} parent=11 // pred_region
          _
        $region48: #{tpu_custom_call.1} parent=11 // pred_fallthru
          _
        // Predicated region
        $region49: #{tpu_custom_call.1} parent=11 // pred_check
          %p340 = pneg %p270
        $region50: #{tpu_custom_call.1} parent=11 // pred_check_branch
          %342 = sbr.rel (%p340) target = $region52
        $region51: #{tpu_custom_call.1} parent=11 // pred_region
          _
        $region52: #{tpu_custom_call.1} parent=11 // pred_fallthru
          _
      $region12: #{tpu_custom_call.1} parent=5 // pred_fallthru
        _
      %p343 = scmp.lt.s32.totalorder %s20, 4
      // Predicated region
      $region53: #{tpu_custom_call.1} parent=5 // pred_check
        %p344 = pneg %p343
      $region54: #{tpu_custom_call.1} parent=5 // pred_check_branch
        %346 = sbr.rel (%p344) target = $region56
      $region55: #{tpu_custom_call.1} parent=5 // pred_region
        // Predicated region
        $region57: #{tpu_custom_call.1} parent=55 // pred_check
          %p347 = pneg %p54
        $region58: #{tpu_custom_call.1} parent=55 // pred_check_branch
          %349 = sbr.rel (%p347) target = $region60
        $region59: #{tpu_custom_call.1} parent=55 // pred_region
          %p350 = scmp.lt.s32.totalorder %s27, 1
          %s351 = scalar_select %p350, %s27, 1
          %p352 = scmp.lt.s32.totalorder %s28, 1
          %s353 = scalar_select %p352, %s28, 1
          %s354 = smul.addr %s351, 2
          %s355 = sadd.s32 %s353, %s354
          %s356 = smul.addr %s355, 8
          %s357 = scalar_lea.vmem %s0, %s356
        $region60: #{tpu_custom_call.1} parent=55 // pred_fallthru
          _
      $region56: #{tpu_custom_call.1} parent=5 // pred_fallthru
        _
      %p358 = scmp.le.s32.totalorder 1, %s20
      %p359 = scmp.lt.s32.totalorder %s20, 5
      %p360 = pnand %p358, %p359
      %p361 = pneg %p360
      // Predicated region
      $region61: #{tpu_custom_call.1} parent=5 // pred_check
        _
      $region62: #{tpu_custom_call.1} parent=5 // pred_check_branch
        %363 = sbr.rel (%p360) target = $region64
      $region63: #{tpu_custom_call.1} parent=5 // pred_region
        %s364 = ssub.s32 %s20, 1
        %p365 = scmp.lt.s32.totalorder %s29, 1
        %s366 = scalar_select %p365, %s29, 1
        %p367 = scmp.lt.s32.totalorder %s30, 1
        %s368 = scalar_select %p367, %s30, 1
        %s369 = smul.addr %s366, 2
        %s370 = sadd.s32 %s368, %s369
        %s371 = smul.addr %s370, 8
        %s372 = scalar_lea.vmem %s0, %s371
        %p373 = pneg %p60
        %p374 = pneg %p57
        %p375 = pneg %p81
        %p376 = pneg %p78
        %p377 = pneg %p102
        %p378 = pneg %p99
        %p379 = pneg %p123
        %p380 = pneg %p120
        %p381 = pneg %p144
        %p382 = pneg %p141
        %p383 = pneg %p165
        %p384 = pneg %p162
        %p385 = pneg %p186
        %p386 = pneg %p183
        %p387 = pneg %p207
        %p388 = pneg %p204
        %p389 = pneg %p228
        %p390 = pneg %p225
        %p391 = pneg %p249
        %p392 = pneg %p246
        %p393 = pneg %p270
        %p394 = pneg %p267
        %p395 = pneg %p298
        %p396 = pneg %p295
        %s397 = sand.u32 %s285, 1
        %s398 = scalar_lea.sflag [#allocation6], %s397
        %s399 = sand.u32 %s285, 1
        %s400 = smul.addr %s399, 8
        %s401 = scalar_lea.vmem [#allocation5], %s400
        %p402 = scmp.lt.s32.totalorder %s29, 1
        %s403 = scalar_select %p402, %s29, 1
        %p404 = scmp.lt.s32.totalorder %s30, 1
        %s405 = scalar_select %p404, %s30, 1
        %s406 = smul.addr %s403, 2
        %s407 = sadd.s32 %s405, %s406
        %s408 = smul.addr %s407, 8
        %s409 = scalar_lea.vmem %s0, %s408
        %p410 = scmp.eq.s32.totalorder %s30, 0
        // Predicated region
        $region65: #{tpu_custom_call.1} parent=63 // pred_check
          %p411 = pneg %p410
        $region66: #{tpu_custom_call.1} parent=63 // pred_check_branch
          %413 = sbr.rel (%p411) target = $region68
        $region67: #{tpu_custom_call.1} parent=63 // pred_region
          %vm414 = vcmask 72704
          %415 = vst.msk [vmem:[#allocation2] sm:$0xff] %vm414, 0.0
          %416 = vst.msk [vmem:[#allocation2 + $0x8] sm:$0xff] %vm414, 0.0
          %417 = vst.msk [vmem:[#allocation2 + $0x10] sm:$0xff] %vm414, 0.0
          %418 = vst.msk [vmem:[#allocation2 + $0x18] sm:$0xff] %vm414, 0.0
          %419 = vst.msk [vmem:[#allocation2 + $0x20] sm:$0xff] %vm414, 0.0
          %420 = vst.msk [vmem:[#allocation2 + $0x28] sm:$0xff] %vm414, 0.0
          %421 = vst.msk [vmem:[#allocation2 + $0x30] sm:$0xff] %vm414, 0.0
          %422 = vst.msk [vmem:[#allocation2 + $0x38] sm:$0xff] %vm414, 0.0
          %423 = vst.msk [vmem:[#allocation2 + $0x40] sm:$0xff] %vm414, 0.0
          %vm424 = vcmask 65536
          %425 = vst.msk [vmem:[#allocation2 + $0x48] sm:$0x1] %vm424, 0.0
          %426 = vst.msk [vmem:[#allocation2 + $0x50] sm:$0xff] %vm414, 0.0
          %427 = vst.msk [vmem:[#allocation2 + $0x58] sm:$0xff] %vm414, 0.0
          %428 = vst.msk [vmem:[#allocation2 + $0x60] sm:$0xff] %vm414, 0.0
          %429 = vst.msk [vmem:[#allocation2 + $0x68] sm:$0xff] %vm414, 0.0
          %430 = vst.msk [vmem:[#allocation2 + $0x70] sm:$0xff] %vm414, 0.0
          %431 = vst.msk [vmem:[#allocation2 + $0x78] sm:$0xff] %vm414, 0.0
          %432 = vst.msk [vmem:[#allocation2 + $0x80] sm:$0xff] %vm414, 0.0
          %433 = vst.msk [vmem:[#allocation2 + $0x88] sm:$0xff] %vm414, 0.0
          %434 = vst.msk [vmem:[#allocation2 + $0x90] sm:$0xff] %vm414, 0.0
          %435 = vst.msk [vmem:[#allocation2 + $0x98] sm:$0x1] %vm424, 0.0
          %vm436 = vcmask 64512
          %437 = vst.msk [vmem:[#allocation3] sm:$0xff] %vm436, 0.0
          %438 = vst.msk [vmem:[#allocation3 + $0x8] sm:$0xff] %vm436, 0.0
          %439 = vst.msk [vmem:[#allocation4] sm:$0xff] %vm436, 0.0
          %440 = vst.msk [vmem:[#allocation4 + $0x8] sm:$0xff] %vm436, 0.0
        $region68: #{tpu_custom_call.1} parent=63 // pred_fallthru
          _
        %v441 = vld [vmem:[%s409] sm:$0xff]
        %v442 = vld [vmem:[%s3] sm:$0x1]
        %v443 = vld [vmem:[%s4] sm:$0x1]
        %vm444 = vcmask 130048
        %v445 = vsel %vm444, %v441, 0.0
        %446 = vadd.xlane.f32.xlu0 %v445
        %v447 = vpop.xlane.xlu0 %446
        %v448 = vrcp.pop 16.0
        %v449 = vmul.f32 %v447, %v448
        %v450 = vsub.f32 %v441, %v449
        %v451 = vmul.f32 %v450, %v450
        %v452 = vsel %vm444, %v451, 0.0
        %453 = vadd.xlane.f32.xlu0 %v452
        %v454 = vpop.xlane.xlu0 %453
        %v455 = vmul.f32 %v454, %v448
        %v456 = vadd.f32 %v455, 1e-05
        %v457 = vrsqrt.pop %v456
        %v458 = vmul.f32 %v450, %v457
        %v460 = vlaneseq
        %v461 = vshrl.u32 %v460, 7
        %v462 = vsub.s32 0, %v461
        %v463 = vrot.slane %v442, %v462
        %v465 = vmul.f32 %v458, %v463
        %v467 = vlaneseq
        %v468 = vshrl.u32 %v467, 7
        %v469 = vsub.s32 0, %v468
        %v470 = vrot.slane %v443, %v469
        %v472 = vadd.f32 %v465, %v470
        %v473 = vld [vmem:[%s1] sm:$0xff]
        %v474 = vld [vmem:[%s1 + $0x8] sm:$0xff]
        %v475 = vld [vmem:[%s2] sm:$0x1]
        %v477 = vlaneseq
        %v478 = vshrl.u32 %v477, 7
        %v479 = vsub.s32 0, %v478
        %v480 = vrot.slane %v475, %v479
        %v483 = vsel %vm444, %v472, 0
        %485 = vmatprep.subr.mxu0 0.0
        %486 = vmatpush1.msra.mxu0 0.0
        %487 = vmatprep.subr.mxu0 0.0
        %488 = vmatpush1.msra.mxu0 0.0
        %489 = vmatprep.subr.mxu0 0.0
        %490 = vmatpush1.msra.mxu0 0.0
        %491 = vmatprep.subr.mxu0 0.0
        %492 = vmatpush1.msra.mxu0 0.0
        %493 = vmatprep.subr.mxu0 0.0
        %494 = vmatpush1.msra.mxu0 0.0
        %495 = vmatprep.subr.mxu0 0.0
        %496 = vmatpush1.msra.mxu0 0.0
        %497 = vmatprep.subr.mxu0 0.0
        %498 = vmatpush1.msra.mxu0 0.0
        %499 = vmatprep.subr.mxu0 0.0
        %500 = vmatpush1.msra.mxu0 0.0
        %501 = vmatprep.subr.mxu0 0.0
        %502 = vmatpush1.msra.mxu0 0.0
        %503 = vmatprep.subr.mxu0 0.0
        %504 = vmatpush1.msra.mxu0 0.0
        %505 = vmatprep.subr.mxu0 0.0
        %506 = vmatpush1.msra.mxu0 0.0
        %507 = vmatprep.subr.mxu0 0.0
        %508 = vmatpush1.msra.mxu0 0.0
        %509 = vmatprep.subr.mxu0 0.0
        %510 = vmatpush1.msra.mxu0 0.0
        %511 = vmatprep.subr.mxu0 0.0
        %512 = vmatpush1.msra.mxu0 0.0
        %513 = vmatprep.subr.mxu0 0.0
        %514 = vmatpush1.msra.mxu0 %v474
        %515 = vmatprep.subr.mxu0 0.0
        %516 = vmatpush1.msra.mxu0 %v473
        %517 = vmatprep.subr.mxu0 0.0
        %518 = vmatpush2.msra.mxu0 0.0
        %519 = vmatprep.subr.mxu0 0.0
        %520 = vmatpush2.msra.mxu0 0.0
        %521 = vmatprep.subr.mxu0 0.0
        %522 = vmatpush2.msra.mxu0 0.0
        %523 = vmatprep.subr.mxu0 0.0
        %524 = vmatpush2.msra.mxu0 0.0
        %525 = vmatprep.subr.mxu0 0.0
        %526 = vmatpush2.msra.mxu0 0.0
        %527 = vmatprep.subr.mxu0 0.0
        %528 = vmatpush2.msra.mxu0 0.0
        %529 = vmatprep.subr.mxu0 0.0
        %530 = vmatpush2.msra.mxu0 0.0
        %531 = vmatprep.subr.mxu0 0.0
        %532 = vmatpush2.msra.mxu0 0.0
        %533 = vmatprep.subr.mxu0 0.0
        %534 = vmatpush2.msra.mxu0 0.0
        %535 = vmatprep.subr.mxu0 0.0
        %536 = vmatpush2.msra.mxu0 0.0
        %537 = vmatprep.subr.mxu0 0.0
        %538 = vmatpush2.msra.mxu0 0.0
        %539 = vmatprep.subr.mxu0 0.0
        %540 = vmatpush2.msra.mxu0 0.0
        %541 = vmatprep.subr.mxu0 0.0
        %542 = vmatpush2.msra.mxu0 0.0
        %543 = vmatprep.subr.mxu0 0.0
        %544 = vmatpush2.msra.mxu0 0.0
        %545 = vmatprep.subr.mxu0 0.0
        %546 = vmatpush2.msra.mxu0 0.0
        %547 = vmatprep.subr.mxu0 0.0
        %548 = vmatpush2.msra.mxu0 0.0
        %549 = vmatprep.mubr.f32.mxu0 0.0
        %550 = vmatmul.mubr.f32.gmra.mxu0 %v483
        %v551 = vpop.f32.mrf.mxu0
        %v552 = vadd.f32 %v480, %v551
        %v553 = vpop.f32.mrf.mxu0
        %554 = vdwg.mxu0
        %556 = vrot.lane.b32.xlu0 %v552, 120
        %v557 = vpop.permute.xlu0 %556
        %v559 = vld [vmem:[#allocation3] sm:$0xff]
        %v560 = vld [vmem:[#allocation3 + $0x8] sm:$0xff]
        %561 = vrot.lane.b32.xlu0 %v552, 112
        %v562 = vpop.permute.xlu0 %561
        %563 = vrot.lane.b32.xlu0 %v557, 112
        %v564 = vpop.permute.xlu0 %563
        %v565 = vld [vmem:[#allocation4] sm:$0xff]
        %v566 = vld [vmem:[#allocation4 + $0x8] sm:$0xff]
        %567 = vrot.lane.b32.xlu0 %v552, 96
        %v568 = vpop.permute.xlu0 %567
        %569 = vrot.lane.b32.xlu0 %v557, 96
        %v570 = vpop.permute.xlu0 %569
        %vm573 = vcmask 64512
        %v574 = vsel %vm573, %v552, 0
        %v577 = vsel %vm573, %v559, 0
        %v579 = vsel %vm573, %v562, 0
        %581 = vmatprep.subr.mxu0 0.0
        %582 = vmatpush1.xpose.msra.mxu0 0.0
        %583 = vmatprep.subr.mxu0 0.0
        %584 = vmatpush1.xpose.msra.mxu0 0.0
        %585 = vmatprep.subr.mxu0 0.0
        %586 = vmatpush1.xpose.msra.mxu0 0.0
        %587 = vmatprep.subr.mxu0 0.0
        %588 = vmatpush1.xpose.msra.mxu0 0.0
        %589 = vmatprep.subr.mxu0 0.0
        %590 = vmatpush1.xpose.msra.mxu0 0.0
        %591 = vmatprep.subr.mxu0 0.0
        %592 = vmatpush1.xpose.msra.mxu0 0.0
        %593 = vmatprep.subr.mxu0 0.0
        %594 = vmatpush1.xpose.msra.mxu0 0.0
        %595 = vmatprep.subr.mxu0 0.0
        %596 = vmatpush1.xpose.msra.mxu0 0.0
        %597 = vmatprep.subr.mxu0 0.0
        %598 = vmatpush1.xpose.msra.mxu0 0.0
        %599 = vmatprep.subr.mxu0 0.0
        %600 = vmatpush1.xpose.msra.mxu0 0.0
        %601 = vmatprep.subr.mxu0 0.0
        %602 = vmatpush1.xpose.msra.mxu0 0.0
        %603 = vmatprep.subr.mxu0 0.0
        %604 = vmatpush1.xpose.msra.mxu0 0.0
        %605 = vmatprep.subr.mxu0 0.0
        %606 = vmatpush1.xpose.msra.mxu0 0.0
        %607 = vmatprep.subr.mxu0 0.0
        %608 = vmatpush1.xpose.msra.mxu0 0.0
        %609 = vmatprep.subr.mxu0 0.0
        %610 = vmatpush1.xpose.msra.mxu0 %v579
        %611 = vmatprep.subr.mxu0 0.0
        %612 = vmatpush1.xpose.msra.mxu0 %v577
        %613 = vmatprep.subr.mxu0 0.0
        %614 = vmatpush2.xpose.msra.mxu0 0.0
        %615 = vmatprep.subr.mxu0 0.0
        %616 = vmatpush2.xpose.msra.mxu0 0.0
        %617 = vmatprep.subr.mxu0 0.0
        %618 = vmatpush2.xpose.msra.mxu0 0.0
        %619 = vmatprep.subr.mxu0 0.0
        %620 = vmatpush2.xpose.msra.mxu0 0.0
        %621 = vmatprep.subr.mxu0 0.0
        %622 = vmatpush2.xpose.msra.mxu0 0.0
        %623 = vmatprep.subr.mxu0 0.0
        %624 = vmatpush2.xpose.msra.mxu0 0.0
        %625 = vmatprep.subr.mxu0 0.0
        %626 = vmatpush2.xpose.msra.mxu0 0.0
        %627 = vmatprep.subr.mxu0 0.0
        %628 = vmatpush2.xpose.msra.mxu0 0.0
        %629 = vmatprep.subr.mxu0 0.0
        %630 = vmatpush2.xpose.msra.mxu0 0.0
        %631 = vmatprep.subr.mxu0 0.0
        %632 = vmatpush2.xpose.msra.mxu0 0.0
        %633 = vmatprep.subr.mxu0 0.0
        %634 = vmatpush2.xpose.msra.mxu0 0.0
        %635 = vmatprep.subr.mxu0 0.0
        %636 = vmatpush2.xpose.msra.mxu0 0.0
        %637 = vmatprep.subr.mxu0 0.0
        %638 = vmatpush2.xpose.msra.mxu0 0.0
        %639 = vmatprep.subr.mxu0 0.0
        %640 = vmatpush2.xpose.msra.mxu0 0.0
        %641 = vmatprep.subr.mxu0 0.0
        %642 = vmatpush2.xpose.msra.mxu0 0.0
        %643 = vmatprep.subr.mxu0 0.0
        %644 = vmatpush2.xpose.msra.mxu0 0.0
        %645 = vmatprep.mubr.f32.mxu0 0.0
        %646 = vmatmul.mubr.f32.gmra.mxu0 %v574
        %v647 = vpop.f32.mrf.mxu0
        %v648 = vadd.f32 0.0, %v647
        %v649 = vpop.f32.mrf.mxu0
        %650 = vdwg.mxu0
        %v651 = vsel %vm573, %v557, 0
        %v654 = vsel %vm573, %v560, 0
        %v656 = vsel %vm573, %v564, 0
        %658 = vmatprep.subr.mxu0 0.0
        %659 = vmatpush1.xpose.msra.mxu0 0.0
        %660 = vmatprep.subr.mxu0 0.0
        %661 = vmatpush1.xpose.msra.mxu0 0.0
        %662 = vmatprep.subr.mxu0 0.0
        %663 = vmatpush1.xpose.msra.mxu0 0.0
        %664 = vmatprep.subr.mxu0 0.0
        %665 = vmatpush1.xpose.msra.mxu0 0.0
        %666 = vmatprep.subr.mxu0 0.0
        %667 = vmatpush1.xpose.msra.mxu0 0.0
        %668 = vmatprep.subr.mxu0 0.0
        %669 = vmatpush1.xpose.msra.mxu0 0.0
        %670 = vmatprep.subr.mxu0 0.0
        %671 = vmatpush1.xpose.msra.mxu0 0.0
        %672 = vmatprep.subr.mxu0 0.0
        %673 = vmatpush1.xpose.msra.mxu0 0.0
        %674 = vmatprep.subr.mxu0 0.0
        %675 = vmatpush1.xpose.msra.mxu0 0.0
        %676 = vmatprep.subr.mxu0 0.0
        %677 = vmatpush1.xpose.msra.mxu0 0.0
        %678 = vmatprep.subr.mxu0 0.0
        %679 = vmatpush1.xpose.msra.mxu0 0.0
        %680 = vmatprep.subr.mxu0 0.0
        %681 = vmatpush1.xpose.msra.mxu0 0.0
        %682 = vmatprep.subr.mxu0 0.0
        %683 = vmatpush1.xpose.msra.mxu0 0.0
        %684 = vmatprep.subr.mxu0 0.0
        %685 = vmatpush1.xpose.msra.mxu0 0.0
        %686 = vmatprep.subr.mxu0 0.0
        %687 = vmatpush1.xpose.msra.mxu0 %v656
        %688 = vmatprep.subr.mxu0 0.0
        %689 = vmatpush1.xpose.msra.mxu0 %v654
        %690 = vmatprep.subr.mxu0 0.0
        %691 = vmatpush2.xpose.msra.mxu0 0.0
        %692 = vmatprep.subr.mxu0 0.0
        %693 = vmatpush2.xpose.msra.mxu0 0.0
        %694 = vmatprep.subr.mxu0 0.0
        %695 = vmatpush2.xpose.msra.mxu0 0.0
        %696 = vmatprep.subr.mxu0 0.0
        %697 = vmatpush2.xpose.msra.mxu0 0.0
        %698 = vmatprep.subr.mxu0 0.0
        %699 = vmatpush2.xpose.msra.mxu0 0.0
        %700 = vmatprep.subr.mxu0 0.0
        %701 = vmatpush2.xpose.msra.mxu0 0.0
        %702 = vmatprep.subr.mxu0 0.0
        %703 = vmatpush2.xpose.msra.mxu0 0.0
        %704 = vmatprep.subr.mxu0 0.0
        %705 = vmatpush2.xpose.msra.mxu0 0.0
        %706 = vmatprep.subr.mxu0 0.0
        %707 = vmatpush2.xpose.msra.mxu0 0.0
        %708 = vmatprep.subr.mxu0 0.0
        %709 = vmatpush2.xpose.msra.mxu0 0.0
        %710 = vmatprep.subr.mxu0 0.0
        %711 = vmatpush2.xpose.msra.mxu0 0.0
        %712 = vmatprep.subr.mxu0 0.0
        %713 = vmatpush2.xpose.msra.mxu0 0.0
        %714 = vmatprep.subr.mxu0 0.0
        %715 = vmatpush2.xpose.msra.mxu0 0.0
        %716 = vmatprep.subr.mxu0 0.0
        %717 = vmatpush2.xpose.msra.mxu0 0.0
        %718 = vmatprep.subr.mxu0 0.0
        %719 = vmatpush2.xpose.msra.mxu0 0.0
        %720 = vmatprep.subr.mxu0 0.0
        %721 = vmatpush2.xpose.msra.mxu0 0.0
        %722 = vmatprep.mubr.f32.mxu0 0.0
        %723 = vmatmul.mubr.f32.gmra.mxu0 %v651
        %v724 = vpop.f32.mrf.mxu0
        %v725 = vadd.f32 0.0, %v724
        %v726 = vpop.f32.mrf.mxu0
        %727 = vdwg.mxu0
        %s728 = smul.u32 %s30, 8
        %v729 = vlaneseq
        %v730 = vshrl.u32 %v729, 7
        %v731 = vstv %s728
        %v732 = vadd.s32 %v731, %v730
        %s733 = ssub.s32 %s30, 1
        %s734 = smul.u32 %s733, 8
        %v735 = vlaneseq
        %v736 = vand.u32 %v735, 127
        %v737 = vstv %s734
        %v738 = vadd.s32 %v737, %v736
        %vm739 = vcmp.le.s32.totalorder %v738, %v732
        %v740 = vsub.s32 %v732, 7
        %vm741 = vcmp.ge.s32.totalorder %v738, %v740
        %vm742 = vmand %vm739, %vm741
        %vm743 = vcmp.ge.s32.totalorder %v738, 0
        %vm744 = vmand %vm742, %vm743
        %v745 = vsel %vm744, 1, 0
        %vm746 = vcmp.eq.s32.totalorder %v745, 1
        %v747 = vsel %vm746, %v648, -inf
        %v748 = vsel %vm746, %v725, -inf
        %v749 = vsel %vm444, %v747, -inf
        %750 = vmax.xlane.f32.xlu0 %v749
        %v751 = vpop.xlane.xlu0 %750
        %v752 = vsel %vm444, %v748, -inf
        %753 = vmax.xlane.f32.xlu0 %v752
        %v754 = vpop.xlane.xlu0 %753
        %v755 = vsub.f32 %v747, %v751
        %v756 = vsub.f32 %v748, %v754
        %v757 = vmul.f32 %v755, 1.442695
        %v758 = vpow.pop %v757
        %v759 = vmul.f32 %v756, 1.442695
        %v760 = vpow.pop %v759
        %v761 = vsel %vm444, %v758, 0.0
        %762 = vadd.xlane.f32.xlu0 %v761
        %v763 = vpop.xlane.xlu0 %762
        %v764 = vsel %vm444, %v760, 0.0
        %765 = vadd.xlane.f32.xlu0 %v764
        %v766 = vpop.xlane.xlu0 %765
        %v767 = vrcp.pop %v763
        %v768 = vrcp.pop %v766
        %v769 = vmul.f32 %v758, %v767
        %v770 = vmul.f32 %v760, %v768
        %v772 = vsel %vm444, %v769, 0
        %774 = vmatprep.subr.mxu0 0.0
        %775 = vmatpush1.msra.mxu0 0.0
        %776 = vmatprep.subr.mxu0 0.0
        %777 = vmatpush1.msra.mxu0 0.0
        %778 = vmatprep.subr.mxu0 0.0
        %779 = vmatpush1.msra.mxu0 0.0
        %780 = vmatprep.subr.mxu0 0.0
        %781 = vmatpush1.msra.mxu0 0.0
        %782 = vmatprep.subr.mxu0 0.0
        %783 = vmatpush1.msra.mxu0 0.0
        %784 = vmatprep.subr.mxu0 0.0
        %785 = vmatpush1.msra.mxu0 0.0
        %786 = vmatprep.subr.mxu0 0.0
        %787 = vmatpush1.msra.mxu0 0.0
        %788 = vmatprep.subr.mxu0 0.0
        %789 = vmatpush1.msra.mxu0 0.0
        %790 = vmatprep.subr.mxu0 0.0
        %791 = vmatpush1.msra.mxu0 0.0
        %792 = vmatprep.subr.mxu0 0.0
        %793 = vmatpush1.msra.mxu0 0.0
        %794 = vmatprep.subr.mxu0 0.0
        %795 = vmatpush1.msra.mxu0 0.0
        %796 = vmatprep.subr.mxu0 0.0
        %797 = vmatpush1.msra.mxu0 0.0
        %798 = vmatprep.subr.mxu0 0.0
        %799 = vmatpush1.msra.mxu0 0.0
        %800 = vmatprep.subr.mxu0 0.0
        %801 = vmatpush1.msra.mxu0 0.0
        %802 = vmatprep.subr.mxu0 0.0
        %803 = vmatpush1.msra.mxu0 %v568
        %804 = vmatprep.subr.mxu0 0.0
        %805 = vmatpush1.msra.mxu0 %v565
        %806 = vmatprep.subr.mxu0 0.0
        %807 = vmatpush2.msra.mxu0 0.0
        %808 = vmatprep.subr.mxu0 0.0
        %809 = vmatpush2.msra.mxu0 0.0
        %810 = vmatprep.subr.mxu0 0.0
        %811 = vmatpush2.msra.mxu0 0.0
        %812 = vmatprep.subr.mxu0 0.0
        %813 = vmatpush2.msra.mxu0 0.0
        %814 = vmatprep.subr.mxu0 0.0
        %815 = vmatpush2.msra.mxu0 0.0
        %816 = vmatprep.subr.mxu0 0.0
        %817 = vmatpush2.msra.mxu0 0.0
        %818 = vmatprep.subr.mxu0 0.0
        %819 = vmatpush2.msra.mxu0 0.0
        %820 = vmatprep.subr.mxu0 0.0
        %821 = vmatpush2.msra.mxu0 0.0
        %822 = vmatprep.subr.mxu0 0.0
        %823 = vmatpush2.msra.mxu0 0.0
        %824 = vmatprep.subr.mxu0 0.0
        %825 = vmatpush2.msra.mxu0 0.0
        %826 = vmatprep.subr.mxu0 0.0
        %827 = vmatpush2.msra.mxu0 0.0
        %828 = vmatprep.subr.mxu0 0.0
        %829 = vmatpush2.msra.mxu0 0.0
        %830 = vmatprep.subr.mxu0 0.0
        %831 = vmatpush2.msra.mxu0 0.0
        %832 = vmatprep.subr.mxu0 0.0
        %833 = vmatpush2.msra.mxu0 0.0
        %834 = vmatprep.subr.mxu0 0.0
        %835 = vmatpush2.msra.mxu0 0.0
        %836 = vmatprep.subr.mxu0 0.0
        %837 = vmatpush2.msra.mxu0 0.0
        %838 = vmatprep.mubr.f32.mxu0 0.0
        %839 = vmatmul.mubr.f32.gmra.mxu0 %v772
        %v840 = vpop.f32.mrf.mxu0
        %v841 = vadd.f32 0.0, %v840
        %v842 = vpop.f32.mrf.mxu0
        %843 = vdwg.mxu0
        %v845 = vsel %vm444, %v770, 0
        %847 = vmatprep.subr.mxu0 0.0
        %848 = vmatpush1.msra.mxu0 0.0
        %849 = vmatprep.subr.mxu0 0.0
        %850 = vmatpush1.msra.mxu0 0.0
        %851 = vmatprep.subr.mxu0 0.0
        %852 = vmatpush1.msra.mxu0 0.0
        %853 = vmatprep.subr.mxu0 0.0
        %854 = vmatpush1.msra.mxu0 0.0
        %855 = vmatprep.subr.mxu0 0.0
        %856 = vmatpush1.msra.mxu0 0.0
        %857 = vmatprep.subr.mxu0 0.0
        %858 = vmatpush1.msra.mxu0 0.0
        %859 = vmatprep.subr.mxu0 0.0
        %860 = vmatpush1.msra.mxu0 0.0
        %861 = vmatprep.subr.mxu0 0.0
        %862 = vmatpush1.msra.mxu0 0.0
        %863 = vmatprep.subr.mxu0 0.0
        %864 = vmatpush1.msra.mxu0 0.0
        %865 = vmatprep.subr.mxu0 0.0
        %866 = vmatpush1.msra.mxu0 0.0
        %867 = vmatprep.subr.mxu0 0.0
        %868 = vmatpush1.msra.mxu0 0.0
        %869 = vmatprep.subr.mxu0 0.0
        %870 = vmatpush1.msra.mxu0 0.0
        %871 = vmatprep.subr.mxu0 0.0
        %872 = vmatpush1.msra.mxu0 0.0
        %873 = vmatprep.subr.mxu0 0.0
        %874 = vmatpush1.msra.mxu0 0.0
        %875 = vmatprep.subr.mxu0 0.0
        %876 = vmatpush1.msra.mxu0 %v570
        %877 = vmatprep.subr.mxu0 0.0
        %878 = vmatpush1.msra.mxu0 %v566
        %879 = vmatprep.subr.mxu0 0.0
        %880 = vmatpush2.msra.mxu0 0.0
        %881 = vmatprep.subr.mxu0 0.0
        %882 = vmatpush2.msra.mxu0 0.0
        %883 = vmatprep.subr.mxu0 0.0
        %884 = vmatpush2.msra.mxu0 0.0
        %885 = vmatprep.subr.mxu0 0.0
        %886 = vmatpush2.msra.mxu0 0.0
        %887 = vmatprep.subr.mxu0 0.0
        %888 = vmatpush2.msra.mxu0 0.0
        %889 = vmatprep.subr.mxu0 0.0
        %890 = vmatpush2.msra.mxu0 0.0
        %891 = vmatprep.subr.mxu0 0.0
        %892 = vmatpush2.msra.mxu0 0.0
        %893 = vmatprep.subr.mxu0 0.0
        %894 = vmatpush2.msra.mxu0 0.0
        %895 = vmatprep.subr.mxu0 0.0
        %896 = vmatpush2.msra.mxu0 0.0
        %897 = vmatprep.subr.mxu0 0.0
        %898 = vmatpush2.msra.mxu0 0.0
        %899 = vmatprep.subr.mxu0 0.0
        %900 = vmatpush2.msra.mxu0 0.0
        %901 = vmatprep.subr.mxu0 0.0
        %902 = vmatpush2.msra.mxu0 0.0
        %903 = vmatprep.subr.mxu0 0.0
        %904 = vmatpush2.msra.mxu0 0.0
        %905 = vmatprep.subr.mxu0 0.0
        %906 = vmatpush2.msra.mxu0 0.0
        %907 = vmatprep.subr.mxu0 0.0
        %908 = vmatpush2.msra.mxu0 0.0
        %909 = vmatprep.subr.mxu0 0.0
        %910 = vmatpush2.msra.mxu0 0.0
        %911 = vmatprep.mubr.f32.mxu0 0.0
        %912 = vmatmul.mubr.f32.gmra.mxu0 %v845
        %v913 = vpop.f32.mrf.mxu0
        %v914 = vadd.f32 0.0, %v913
        %v915 = vpop.f32.mrf.mxu0
        %916 = vdwg.mxu0
        %v917 = vsel %vm573, %v568, 1.0
        %v918 = vsel %vm573, %v570, 1.0
        %vm919 = vcmp.le.s32.totalorder %v736, %v730
        %v920 = vadd.f32 %v648, 1.0
        %v921 = vadd.f32 %v725, 1.0
        %v922 = vmul.f32 %v648, 0.5
        %v923 = vmul.f32 %v725, 0.5
        %v924 = vmul.f32 %v922, %v648
        %v925 = vmul.f32 %v923, %v725
        %v926 = vadd.f32 %v920, %v924
        %v927 = vadd.f32 %v921, %v925
        %v928 = vsel %vm919, 1, 0
        %vm929 = vcmp.eq.s32.totalorder %v928, 1
        %932 = vrot.lane.b32.xlu0 %v926, 120
        %v933 = vpop.permute.xlu0 %932
        %934 = vrot.lane.b32.xlu0 %v927, 120
        %v935 = vpop.permute.xlu0 %934
        %v938 = vsel %vm929, %v933, 0.0
        %v939 = vsel %vm929, %v935, 0.0
        %v940 = vmul.f32 %v552, 0.70710677
        %v941 = vmul.f32 %v557, 0.70710677
        %943 = vset.pattern.permute.xlu0 0
        %944 = vperm.xlu0 %943, %v940
        %v945 = vpop.permute.xlu0 %944
        %948 = vset.pattern.permute.xlu0 0
        %949 = vperm.xlu0 %948, %v941
        %v950 = vpop.permute.xlu0 %949
        %v952 = vmul.f32 %v552, %v945
        %v953 = vmul.f32 %v557, %v950
        %954 = vset.pattern.permute.xlu0 1
        %955 = vperm.xlu0 %954, %v940
        %v956 = vpop.permute.xlu0 %955
        %958 = vset.pattern.permute.xlu0 1
        %959 = vperm.xlu0 %958, %v941
        %v960 = vpop.permute.xlu0 %959
        %v962 = vmul.f32 %v552, %v956
        %v963 = vmul.f32 %v557, %v960
        %964 = vset.pattern.permute.xlu0 2
        %965 = vperm.xlu0 %964, %v940
        %v966 = vpop.permute.xlu0 %965
        %968 = vset.pattern.permute.xlu0 2
        %969 = vperm.xlu0 %968, %v941
        %v970 = vpop.permute.xlu0 %969
        %v972 = vmul.f32 %v552, %v966
        %v973 = vmul.f32 %v557, %v970
        %974 = vset.pattern.permute.xlu0 3
        %975 = vperm.xlu0 %974, %v940
        %v976 = vpop.permute.xlu0 %975
        %978 = vset.pattern.permute.xlu0 3
        %979 = vperm.xlu0 %978, %v941
        %v980 = vpop.permute.xlu0 %979
        %v982 = vmul.f32 %v552, %v976
        %v983 = vmul.f32 %v557, %v980
        %984 = vset.pattern.permute.xlu0 4
        %985 = vperm.xlu0 %984, %v940
        %v986 = vpop.permute.xlu0 %985
        %988 = vset.pattern.permute.xlu0 4
        %989 = vperm.xlu0 %988, %v941
        %v990 = vpop.permute.xlu0 %989
        %v992 = vmul.f32 %v552, %v986
        %v993 = vmul.f32 %v557, %v990
        %994 = vset.pattern.permute.xlu0 5
        %995 = vperm.xlu0 %994, %v940
        %v996 = vpop.permute.xlu0 %995
        %998 = vset.pattern.permute.xlu0 5
        %999 = vperm.xlu0 %998, %v941
        %v1000 = vpop.permute.xlu0 %999
        %v1002 = vmul.f32 %v552, %v996
        %v1003 = vmul.f32 %v557, %v1000
        %1004 = vset.pattern.permute.xlu0 6
        %1005 = vperm.xlu0 %1004, %v940
        %v1006 = vpop.permute.xlu0 %1005
        %1008 = vset.pattern.permute.xlu0 6
        %1009 = vperm.xlu0 %1008, %v941
        %v1010 = vpop.permute.xlu0 %1009
        %v1012 = vmul.f32 %v552, %v1006
        %v1013 = vmul.f32 %v557, %v1010
        %1014 = vset.pattern.permute.xlu0 7
        %1015 = vperm.xlu0 %1014, %v940
        %v1016 = vpop.permute.xlu0 %1015
        %1018 = vset.pattern.permute.xlu0 7
        %1019 = vperm.xlu0 %1018, %v941
        %v1020 = vpop.permute.xlu0 %1019
        %v1022 = vmul.f32 %v552, %v1016
        %v1023 = vmul.f32 %v557, %v1020
        %1024 = vrot.lane.b32.xlu0 %v552, 1
        %v1025 = vpop.permute.xlu0 %1024
        %1026 = vrot.lane.b32.xlu0 %v557, 1
        %v1027 = vpop.permute.xlu0 %1026
        %1032 = vrot.lane.b32.xlu0 %v952, 9
        %v1033 = vpop.permute.xlu0 %1032
        %1034 = vrot.lane.b32.xlu0 %v953, 9
        %v1035 = vpop.permute.xlu0 %1034
        %1040 = vrot.lane.b32.xlu0 %v962, 17
        %v1041 = vpop.permute.xlu0 %1040
        %1042 = vrot.lane.b32.xlu0 %v963, 17
        %v1043 = vpop.permute.xlu0 %1042
        %1048 = vrot.lane.b32.xlu0 %v972, 25
        %v1049 = vpop.permute.xlu0 %1048
        %1050 = vrot.lane.b32.xlu0 %v973, 25
        %v1051 = vpop.permute.xlu0 %1050
        %1056 = vrot.lane.b32.xlu0 %v982, 33
        %v1057 = vpop.permute.xlu0 %1056
        %1058 = vrot.lane.b32.xlu0 %v983, 33
        %v1059 = vpop.permute.xlu0 %1058
        %1064 = vrot.lane.b32.xlu0 %v992, 41
        %v1065 = vpop.permute.xlu0 %1064
        %1066 = vrot.lane.b32.xlu0 %v993, 41
        %v1067 = vpop.permute.xlu0 %1066
        %1072 = vrot.lane.b32.xlu0 %v1002, 49
        %v1073 = vpop.permute.xlu0 %1072
        %1074 = vrot.lane.b32.xlu0 %v1003, 49
        %v1075 = vpop.permute.xlu0 %1074
        %1080 = vrot.lane.b32.xlu0 %v1012, 57
        %v1081 = vpop.permute.xlu0 %1080
        %1082 = vrot.lane.b32.xlu0 %v1013, 57
        %v1083 = vpop.permute.xlu0 %1082
        %1088 = vrot.lane.b32.xlu0 %v1022, 65
        %v1089 = vpop.permute.xlu0 %1088
        %1090 = vrot.lane.b32.xlu0 %v1023, 65
        %v1091 = vpop.permute.xlu0 %1090
        %vm1094 = vcmask 7168
        %v1095 = vsel %vm1094, 1.0, %v1025
        %v1096 = vsel %vm1094, 1.0, %v1027
        %vm1097 = vcmask 72704
        %v1098 = vsel %vm1097, %v1095, %v1033
        %v1099 = vsel %vm1097, %v1096, %v1035
        %vm1100 = vcmask 138240
        %v1101 = vsel %vm1100, %v1098, %v1041
        %v1102 = vsel %vm1100, %v1099, %v1043
        %vm1103 = vcmask 203776
        %v1104 = vsel %vm1103, %v1101, %v1049
        %v1105 = vsel %vm1103, %v1102, %v1051
        %vm1106 = vcmask 269312
        %v1107 = vsel %vm1106, %v1104, %v1057
        %v1108 = vsel %vm1106, %v1105, %v1059
        %vm1109 = vcmask 334848
        %v1110 = vsel %vm1109, %v1107, %v1065
        %v1111 = vsel %vm1109, %v1108, %v1067
        %vm1112 = vcmask 400384
        %v1113 = vsel %vm1112, %v1110, %v1073
        %v1114 = vsel %vm1112, %v1111, %v1075
        %vm1115 = vcmask 465920
        %v1116 = vsel %vm1115, %v1113, %v1081
        %v1117 = vsel %vm1115, %v1114, %v1083
        %vm1118 = vcmask 531456
        %v1119 = vsel %vm1118, %v1116, %v1089
        %v1120 = vsel %vm1118, %v1117, %v1091
        %v1121 = vld [vmem:[#allocation2] sm:$0xff]
        %v1122 = vld [vmem:[#allocation2 + $0x8] sm:$0xff]
        %v1123 = vld [vmem:[#allocation2 + $0x10] sm:$0xff]
        %v1124 = vld [vmem:[#allocation2 + $0x18] sm:$0xff]
        %v1125 = vld [vmem:[#allocation2 + $0x20] sm:$0xff]
        %v1126 = vld [vmem:[#allocation2 + $0x28] sm:$0xff]
        %v1127 = vld [vmem:[#allocation2 + $0x30] sm:$0xff]
        %v1128 = vld [vmem:[#allocation2 + $0x38] sm:$0xff]
        %v1129 = vld [vmem:[#allocation2 + $0x40] sm:$0xff]
        %v1130 = vld [vmem:[#allocation2 + $0x48] sm:$0x1]
        %v1131 = vld [vmem:[#allocation2 + $0x50] sm:$0xff]
        %v1132 = vld [vmem:[#allocation2 + $0x58] sm:$0xff]
        %v1133 = vld [vmem:[#allocation2 + $0x60] sm:$0xff]
        %v1134 = vld [vmem:[#allocation2 + $0x68] sm:$0xff]
        %v1135 = vld [vmem:[#allocation2 + $0x70] sm:$0xff]
        %v1136 = vld [vmem:[#allocation2 + $0x78] sm:$0xff]
        %v1137 = vld [vmem:[#allocation2 + $0x80] sm:$0xff]
        %v1138 = vld [vmem:[#allocation2 + $0x88] sm:$0xff]
        %v1139 = vld [vmem:[#allocation2 + $0x90] sm:$0xff]
        %v1140 = vld [vmem:[#allocation2 + $0x98] sm:$0x1]
        %vm1141 = vcmask 596992
        %v1143 = vsel %vm1141, %v1119, 0
        %vm1145 = vcmask 1040384
        %v1147 = vsel %vm1145, %v1130, 0
        %1149 = vmatprep.subr.mxu0 0.0
        %1150 = vmatpush1.msra.mxu0 0.0
        %1151 = vmatprep.subr.mxu0 0.0
        %1152 = vmatpush1.msra.mxu0 0.0
        %1153 = vmatprep.subr.mxu0 0.0
        %1154 = vmatpush1.msra.mxu0 0.0
        %1155 = vmatprep.subr.mxu0 0.0
        %1156 = vmatpush1.msra.mxu0 0.0
        %1157 = vmatprep.subr.mxu0 0.0
        %1158 = vmatpush1.msra.mxu0 0.0
        %1159 = vmatprep.subr.mxu0 0.0
        %1160 = vmatpush1.msra.mxu0 0.0
        %1161 = vmatprep.subr.mxu0 0.0
        %1162 = vmatpush1.msra.mxu0 %v1147
        %1163 = vmatprep.subr.mxu0 0.0
        %1164 = vmatpush1.msra.mxu0 %v1129
        %1165 = vmatprep.subr.mxu0 0.0
        %1166 = vmatpush1.msra.mxu0 %v1128
        %1167 = vmatprep.subr.mxu0 0.0
        %1168 = vmatpush1.msra.mxu0 %v1127
        %1169 = vmatprep.subr.mxu0 0.0
        %1170 = vmatpush1.msra.mxu0 %v1126
        %1171 = vmatprep.subr.mxu0 0.0
        %1172 = vmatpush1.msra.mxu0 %v1125
        %1173 = vmatprep.subr.mxu0 0.0
        %1174 = vmatpush1.msra.mxu0 %v1124
        %1175 = vmatprep.subr.mxu0 0.0
        %1176 = vmatpush1.msra.mxu0 %v1123
        %1177 = vmatprep.subr.mxu0 0.0
        %1178 = vmatpush1.msra.mxu0 %v1122
        %1179 = vmatprep.subr.mxu0 0.0
        %1180 = vmatpush1.msra.mxu0 %v1121
        %1181 = vmatprep.subr.mxu0 0.0
        %1182 = vmatpush2.msra.mxu0 0.0
        %1183 = vmatprep.subr.mxu0 0.0
        %1184 = vmatpush2.msra.mxu0 0.0
        %1185 = vmatprep.subr.mxu0 0.0
        %1186 = vmatpush2.msra.mxu0 0.0
        %1187 = vmatprep.subr.mxu0 0.0
        %1188 = vmatpush2.msra.mxu0 0.0
        %1189 = vmatprep.subr.mxu0 0.0
        %1190 = vmatpush2.msra.mxu0 0.0
        %1191 = vmatprep.subr.mxu0 0.0
        %1192 = vmatpush2.msra.mxu0 0.0
        %1193 = vmatprep.subr.mxu0 0.0
        %1194 = vmatpush2.msra.mxu0 0.0
        %1195 = vmatprep.subr.mxu0 0.0
        %1196 = vmatpush2.msra.mxu0 0.0
        %1197 = vmatprep.subr.mxu0 0.0
        %1198 = vmatpush2.msra.mxu0 0.0
        %1199 = vmatprep.subr.mxu0 0.0
        %1200 = vmatpush2.msra.mxu0 0.0
        %1201 = vmatprep.subr.mxu0 0.0
        %1202 = vmatpush2.msra.mxu0 0.0
        %1203 = vmatprep.subr.mxu0 0.0
        %1204 = vmatpush2.msra.mxu0 0.0
        %1205 = vmatprep.subr.mxu0 0.0
        %1206 = vmatpush2.msra.mxu0 0.0
        %1207 = vmatprep.subr.mxu0 0.0
        %1208 = vmatpush2.msra.mxu0 0.0
        %1209 = vmatprep.subr.mxu0 0.0
        %1210 = vmatpush2.msra.mxu0 0.0
        %1211 = vmatprep.subr.mxu0 0.0
        %1212 = vmatpush2.msra.mxu0 0.0
        %1213 = vmatprep.mubr.f32.mxu0 0.0
        %1214 = vmatmul.mubr.f32.gmra.mxu0 %v1143
        %v1215 = vpop.f32.mrf.mxu0
        %v1216 = vadd.f32 0.0, %v1215
        %v1217 = vpop.f32.mrf.mxu0
        %1218 = vdwg.mxu0
        %v1220 = vsel %vm1141, %v1120, 0
        %v1223 = vsel %vm1145, %v1140, 0
        %1225 = vmatprep.subr.mxu0 0.0
        %1226 = vmatpush1.msra.mxu0 0.0
        %1227 = vmatprep.subr.mxu0 0.0
        %1228 = vmatpush1.msra.mxu0 0.0
        %1229 = vmatprep.subr.mxu0 0.0
        %1230 = vmatpush1.msra.mxu0 0.0
        %1231 = vmatprep.subr.mxu0 0.0
        %1232 = vmatpush1.msra.mxu0 0.0
        %1233 = vmatprep.subr.mxu0 0.0
        %1234 = vmatpush1.msra.mxu0 0.0
        %1235 = vmatprep.subr.mxu0 0.0
        %1236 = vmatpush1.msra.mxu0 0.0
        %1237 = vmatprep.subr.mxu0 0.0
        %1238 = vmatpush1.msra.mxu0 %v1223
        %1239 = vmatprep.subr.mxu0 0.0
        %1240 = vmatpush1.msra.mxu0 %v1139
        %1241 = vmatprep.subr.mxu0 0.0
        %1242 = vmatpush1.msra.mxu0 %v1138
        %1243 = vmatprep.subr.mxu0 0.0
        %1244 = vmatpush1.msra.mxu0 %v1137
        %1245 = vmatprep.subr.mxu0 0.0
        %1246 = vmatpush1.msra.mxu0 %v1136
        %1247 = vmatprep.subr.mxu0 0.0
        %1248 = vmatpush1.msra.mxu0 %v1135
        %1249 = vmatprep.subr.mxu0 0.0
        %1250 = vmatpush1.msra.mxu0 %v1134
        %1251 = vmatprep.subr.mxu0 0.0
        %1252 = vmatpush1.msra.mxu0 %v1133
        %1253 = vmatprep.subr.mxu0 0.0
        %1254 = vmatpush1.msra.mxu0 %v1132
        %1255 = vmatprep.subr.mxu0 0.0
        %1256 = vmatpush1.msra.mxu0 %v1131
        %1257 = vmatprep.subr.mxu0 0.0
        %1258 = vmatpush2.msra.mxu0 0.0
        %1259 = vmatprep.subr.mxu0 0.0
        %1260 = vmatpush2.msra.mxu0 0.0
        %1261 = vmatprep.subr.mxu0 0.0
        %1262 = vmatpush2.msra.mxu0 0.0
        %1263 = vmatprep.subr.mxu0 0.0
        %1264 = vmatpush2.msra.mxu0 0.0
        %1265 = vmatprep.subr.mxu0 0.0
        %1266 = vmatpush2.msra.mxu0 0.0
        %1267 = vmatprep.subr.mxu0 0.0
        %1268 = vmatpush2.msra.mxu0 0.0
        %1269 = vmatprep.subr.mxu0 0.0
        %1270 = vmatpush2.msra.mxu0 0.0
        %1271 = vmatprep.subr.mxu0 0.0
        %1272 = vmatpush2.msra.mxu0 0.0
        %1273 = vmatprep.subr.mxu0 0.0
        %1274 = vmatpush2.msra.mxu0 0.0
        %1275 = vmatprep.subr.mxu0 0.0
        %1276 = vmatpush2.msra.mxu0 0.0
        %1277 = vmatprep.subr.mxu0 0.0
        %1278 = vmatpush2.msra.mxu0 0.0
        %1279 = vmatprep.subr.mxu0 0.0
        %1280 = vmatpush2.msra.mxu0 0.0
        %1281 = vmatprep.subr.mxu0 0.0
        %1282 = vmatpush2.msra.mxu0 0.0
        %1283 = vmatprep.subr.mxu0 0.0
        %1284 = vmatpush2.msra.mxu0 0.0
        %1285 = vmatprep.subr.mxu0 0.0
        %1286 = vmatpush2.msra.mxu0 0.0
        %1287 = vmatprep.subr.mxu0 0.0
        %1288 = vmatpush2.msra.mxu0 0.0
        %1289 = vmatprep.mubr.f32.mxu0 0.0
        %1290 = vmatmul.mubr.f32.gmra.mxu0 %v1220
        %v1291 = vpop.f32.mrf.mxu0
        %v1292 = vadd.f32 0.0, %v1291
        %v1293 = vpop.f32.mrf.mxu0
        %1294 = vdwg.mxu0
        %v1296 = vsel %vm573, %v938, 0
        %1298 = vmatprep.subr.mxu0 0.0
        %1299 = vmatpush1.msra.mxu0 0.0
        %1300 = vmatprep.subr.mxu0 0.0
        %1301 = vmatpush1.msra.mxu0 0.0
        %1302 = vmatprep.subr.mxu0 0.0
        %1303 = vmatpush1.msra.mxu0 0.0
        %1304 = vmatprep.subr.mxu0 0.0
        %1305 = vmatpush1.msra.mxu0 0.0
        %1306 = vmatprep.subr.mxu0 0.0
        %1307 = vmatpush1.msra.mxu0 0.0
        %1308 = vmatprep.subr.mxu0 0.0
        %1309 = vmatpush1.msra.mxu0 0.0
        %1310 = vmatprep.subr.mxu0 0.0
        %1311 = vmatpush1.msra.mxu0 0.0
        %1312 = vmatprep.subr.mxu0 0.0
        %1313 = vmatpush1.msra.mxu0 0.0
        %1314 = vmatprep.subr.mxu0 0.0
        %1315 = vmatpush1.msra.mxu0 0.0
        %1316 = vmatprep.subr.mxu0 0.0
        %1317 = vmatpush1.msra.mxu0 0.0
        %1318 = vmatprep.subr.mxu0 0.0
        %1319 = vmatpush1.msra.mxu0 0.0
        %1320 = vmatprep.subr.mxu0 0.0
        %1321 = vmatpush1.msra.mxu0 0.0
        %1322 = vmatprep.subr.mxu0 0.0
        %1323 = vmatpush1.msra.mxu0 0.0
        %1324 = vmatprep.subr.mxu0 0.0
        %1325 = vmatpush1.msra.mxu0 0.0
        %1326 = vmatprep.subr.mxu0 0.0
        %1327 = vmatpush1.msra.mxu0 0.0
        %1328 = vmatprep.subr.mxu0 0.0
        %1329 = vmatpush1.msra.mxu0 %v917
        %1330 = vmatprep.subr.mxu0 0.0
        %1331 = vmatpush2.msra.mxu0 0.0
        %1332 = vmatprep.subr.mxu0 0.0
        %1333 = vmatpush2.msra.mxu0 0.0
        %1334 = vmatprep.subr.mxu0 0.0
        %1335 = vmatpush2.msra.mxu0 0.0
        %1336 = vmatprep.subr.mxu0 0.0
        %1337 = vmatpush2.msra.mxu0 0.0
        %1338 = vmatprep.subr.mxu0 0.0
        %1339 = vmatpush2.msra.mxu0 0.0
        %1340 = vmatprep.subr.mxu0 0.0
        %1341 = vmatpush2.msra.mxu0 0.0
        %1342 = vmatprep.subr.mxu0 0.0
        %1343 = vmatpush2.msra.mxu0 0.0
        %1344 = vmatprep.subr.mxu0 0.0
        %1345 = vmatpush2.msra.mxu0 0.0
        %1346 = vmatprep.subr.mxu0 0.0
        %1347 = vmatpush2.msra.mxu0 0.0
        %1348 = vmatprep.subr.mxu0 0.0
        %1349 = vmatpush2.msra.mxu0 0.0
        %1350 = vmatprep.subr.mxu0 0.0
        %1351 = vmatpush2.msra.mxu0 0.0
        %1352 = vmatprep.subr.mxu0 0.0
        %1353 = vmatpush2.msra.mxu0 0.0
        %1354 = vmatprep.subr.mxu0 0.0
        %1355 = vmatpush2.msra.mxu0 0.0
        %1356 = vmatprep.subr.mxu0 0.0
        %1357 = vmatpush2.msra.mxu0 0.0
        %1358 = vmatprep.subr.mxu0 0.0
        %1359 = vmatpush2.msra.mxu0 0.0
        %1360 = vmatprep.subr.mxu0 0.0
        %1361 = vmatpush2.msra.mxu0 0.0
        %1362 = vmatprep.mubr.f32.mxu0 0.0
        %1363 = vmatmul.mubr.f32.gmra.mxu0 %v1296
        %v1364 = vpop.f32.mrf.mxu0
        %v1365 = vadd.f32 %v1216, %v1364
        %v1366 = vpop.f32.mrf.mxu0
        %1367 = vdwg.mxu0
        %v1369 = vsel %vm573, %v939, 0
        %1371 = vmatprep.subr.mxu0 0.0
        %1372 = vmatpush1.msra.mxu0 0.0
        %1373 = vmatprep.subr.mxu0 0.0
        %1374 = vmatpush1.msra.mxu0 0.0
        %1375 = vmatprep.subr.mxu0 0.0
        %1376 = vmatpush1.msra.mxu0 0.0
        %1377 = vmatprep.subr.mxu0 0.0
        %1378 = vmatpush1.msra.mxu0 0.0
        %1379 = vmatprep.subr.mxu0 0.0
        %1380 = vmatpush1.msra.mxu0 0.0
        %1381 = vmatprep.subr.mxu0 0.0
        %1382 = vmatpush1.msra.mxu0 0.0
        %1383 = vmatprep.subr.mxu0 0.0
        %1384 = vmatpush1.msra.mxu0 0.0
        %1385 = vmatprep.subr.mxu0 0.0
        %1386 = vmatpush1.msra.mxu0 0.0
        %1387 = vmatprep.subr.mxu0 0.0
        %1388 = vmatpush1.msra.mxu0 0.0
        %1389 = vmatprep.subr.mxu0 0.0
        %1390 = vmatpush1.msra.mxu0 0.0
        %1391 = vmatprep.subr.mxu0 0.0
        %1392 = vmatpush1.msra.mxu0 0.0
        %1393 = vmatprep.subr.mxu0 0.0
        %1394 = vmatpush1.msra.mxu0 0.0
        %1395 = vmatprep.subr.mxu0 0.0
        %1396 = vmatpush1.msra.mxu0 0.0
        %1397 = vmatprep.subr.mxu0 0.0
        %1398 = vmatpush1.msra.mxu0 0.0
        %1399 = vmatprep.subr.mxu0 0.0
        %1400 = vmatpush1.msra.mxu0 0.0
        %1401 = vmatprep.subr.mxu0 0.0
        %1402 = vmatpush1.msra.mxu0 %v918
        %1403 = vmatprep.subr.mxu0 0.0
        %1404 = vmatpush2.msra.mxu0 0.0
        %1405 = vmatprep.subr.mxu0 0.0
        %1406 = vmatpush2.msra.mxu0 0.0
        %1407 = vmatprep.subr.mxu0 0.0
        %1408 = vmatpush2.msra.mxu0 0.0
        %1409 = vmatprep.subr.mxu0 0.0
        %1410 = vmatpush2.msra.mxu0 0.0
        %1411 = vmatprep.subr.mxu0 0.0
        %1412 = vmatpush2.msra.mxu0 0.0
        %1413 = vmatprep.subr.mxu0 0.0
        %1414 = vmatpush2.msra.mxu0 0.0
        %1415 = vmatprep.subr.mxu0 0.0
        %1416 = vmatpush2.msra.mxu0 0.0
        %1417 = vmatprep.subr.mxu0 0.0
        %1418 = vmatpush2.msra.mxu0 0.0
        %1419 = vmatprep.subr.mxu0 0.0
        %1420 = vmatpush2.msra.mxu0 0.0
        %1421 = vmatprep.subr.mxu0 0.0
        %1422 = vmatpush2.msra.mxu0 0.0
        %1423 = vmatprep.subr.mxu0 0.0
        %1424 = vmatpush2.msra.mxu0 0.0
        %1425 = vmatprep.subr.mxu0 0.0
        %1426 = vmatpush2.msra.mxu0 0.0
        %1427 = vmatprep.subr.mxu0 0.0
        %1428 = vmatpush2.msra.mxu0 0.0
        %1429 = vmatprep.subr.mxu0 0.0
        %1430 = vmatpush2.msra.mxu0 0.0
        %1431 = vmatprep.subr.mxu0 0.0
        %1432 = vmatpush2.msra.mxu0 0.0
        %1433 = vmatprep.subr.mxu0 0.0
        %1434 = vmatpush2.msra.mxu0 0.0
        %1435 = vmatprep.mubr.f32.mxu0 0.0
        %1436 = vmatmul.mubr.f32.gmra.mxu0 %v1369
        %v1437 = vpop.f32.mrf.mxu0
        %v1438 = vadd.f32 %v1292, %v1437
        %v1439 = vpop.f32.mrf.mxu0
        %1440 = vdwg.mxu0
        %v1441 = vadd.f32 %v1365, 1e-08
        %v1442 = vadd.f32 %v1438, 1e-08
        %v1443 = vrcp.pop %v1441
        %v1444 = vrcp.pop %v1442
        %1446 = vset.pattern.permute.xlu0 8
        %1447 = vperm.xlu0 %1446, %v1443
        %v1448 = vpop.permute.xlu0 %1447
        %1451 = vset.pattern.permute.xlu0 8
        %1452 = vperm.xlu0 %1451, %v1444
        %v1453 = vpop.permute.xlu0 %1452
        %v1455 = vmul.f32 %v1365, %v1448
        %v1456 = vmul.f32 %v1438, %v1453
        %v1457 = vadd.f32 %v1455, %v841
        %v1458 = vadd.f32 %v1456, %v914
        %1460 = vrot.lane.b32.xlu0 %v1458, 8
        %v1461 = vpop.permute.xlu0 %1460
        %v1463 = vsel %vm573, %v1457, %v1461
        %v1464 = vadd.f32 %v441, %v1463
        %v1465 = vld [vmem:[%s5] sm:$0x1]
        %v1466 = vld [vmem:[%s6] sm:$0x1]
        %v1467 = vsel %vm444, %v1464, 0.0
        %1468 = vadd.xlane.f32.xlu0 %v1467
        %v1469 = vpop.xlane.xlu0 %1468
        %v1470 = vmul.f32 %v1469, %v448
        %v1471 = vsub.f32 %v1464, %v1470
        %v1472 = vmul.f32 %v1471, %v1471
        %v1473 = vsel %vm444, %v1472, 0.0
        %1474 = vadd.xlane.f32.xlu0 %v1473
        %v1475 = vpop.xlane.xlu0 %1474
        %v1476 = vmul.f32 %v1475, %v448
        %v1477 = vadd.f32 %v1476, 1e-05
        %v1478 = vrsqrt.pop %v1477
        %v1479 = vmul.f32 %v1471, %v1478
        %v1481 = vlaneseq
        %v1482 = vshrl.u32 %v1481, 7
        %v1483 = vsub.s32 0, %v1482
        %v1484 = vrot.slane %v1465, %v1483
        %v1486 = vmul.f32 %v1479, %v1484
        %v1488 = vlaneseq
        %v1489 = vshrl.u32 %v1488, 7
        %v1490 = vsub.s32 0, %v1489
        %v1491 = vrot.slane %v1466, %v1490
        %v1493 = vadd.f32 %v1486, %v1491
        %v1494 = vld [vmem:[%s7] sm:$0xff]
        %v1495 = vld [vmem:[%s7 + $0x8] sm:$0xff]
        %v1496 = vld [vmem:[%s8] sm:$0x1]
        %v1498 = vlaneseq
        %v1499 = vshrl.u32 %v1498, 7
        %v1500 = vsub.s32 0, %v1499
        %v1501 = vrot.slane %v1496, %v1500
        %v1504 = vsel %vm444, %v1493, 0
        %1506 = vmatprep.subr.mxu0 0.0
        %1507 = vmatpush1.msra.mxu0 0.0
        %1508 = vmatprep.subr.mxu0 0.0
        %1509 = vmatpush1.msra.mxu0 0.0
        %1510 = vmatprep.subr.mxu0 0.0
        %1511 = vmatpush1.msra.mxu0 0.0
        %1512 = vmatprep.subr.mxu0 0.0
        %1513 = vmatpush1.msra.mxu0 0.0
        %1514 = vmatprep.subr.mxu0 0.0
        %1515 = vmatpush1.msra.mxu0 0.0
        %1516 = vmatprep.subr.mxu0 0.0
        %1517 = vmatpush1.msra.mxu0 0.0
        %1518 = vmatprep.subr.mxu0 0.0
        %1519 = vmatpush1.msra.mxu0 0.0
        %1520 = vmatprep.subr.mxu0 0.0
        %1521 = vmatpush1.msra.mxu0 0.0
        %1522 = vmatprep.subr.mxu0 0.0
        %1523 = vmatpush1.msra.mxu0 0.0
        %1524 = vmatprep.subr.mxu0 0.0
        %1525 = vmatpush1.msra.mxu0 0.0
        %1526 = vmatprep.subr.mxu0 0.0
        %1527 = vmatpush1.msra.mxu0 0.0
        %1528 = vmatprep.subr.mxu0 0.0
        %1529 = vmatpush1.msra.mxu0 0.0
        %1530 = vmatprep.subr.mxu0 0.0
        %1531 = vmatpush1.msra.mxu0 0.0
        %1532 = vmatprep.subr.mxu0 0.0
        %1533 = vmatpush1.msra.mxu0 0.0
        %1534 = vmatprep.subr.mxu0 0.0
        %1535 = vmatpush1.msra.mxu0 %v1495
        %1536 = vmatprep.subr.mxu0 0.0
        %1537 = vmatpush1.msra.mxu0 %v1494
        %1538 = vmatprep.subr.mxu0 0.0
        %1539 = vmatpush2.msra.mxu0 0.0
        %1540 = vmatprep.subr.mxu0 0.0
        %1541 = vmatpush2.msra.mxu0 0.0
        %1542 = vmatprep.subr.mxu0 0.0
        %1543 = vmatpush2.msra.mxu0 0.0
        %1544 = vmatprep.subr.mxu0 0.0
        %1545 = vmatpush2.msra.mxu0 0.0
        %1546 = vmatprep.subr.mxu0 0.0
        %1547 = vmatpush2.msra.mxu0 0.0
        %1548 = vmatprep.subr.mxu0 0.0
        %1549 = vmatpush2.msra.mxu0 0.0
        %1550 = vmatprep.subr.mxu0 0.0
        %1551 = vmatpush2.msra.mxu0 0.0
        %1552 = vmatprep.subr.mxu0 0.0
        %1553 = vmatpush2.msra.mxu0 0.0
        %1554 = vmatprep.subr.mxu0 0.0
        %1555 = vmatpush2.msra.mxu0 0.0
        %1556 = vmatprep.subr.mxu0 0.0
        %1557 = vmatpush2.msra.mxu0 0.0
        %1558 = vmatprep.subr.mxu0 0.0
        %1559 = vmatpush2.msra.mxu0 0.0
        %1560 = vmatprep.subr.mxu0 0.0
        %1561 = vmatpush2.msra.mxu0 0.0
        %1562 = vmatprep.subr.mxu0 0.0
        %1563 = vmatpush2.msra.mxu0 0.0
        %1564 = vmatprep.subr.mxu0 0.0
        %1565 = vmatpush2.msra.mxu0 0.0
        %1566 = vmatprep.subr.mxu0 0.0
        %1567 = vmatpush2.msra.mxu0 0.0
        %1568 = vmatprep.subr.mxu0 0.0
        %1569 = vmatpush2.msra.mxu0 0.0
        %1570 = vmatprep.mubr.f32.mxu0 0.0
        %1571 = vmatmul.mubr.f32.gmra.mxu0 %v1504
        %v1572 = vpop.f32.mrf.mxu0
        %v1573 = vadd.f32 %v1501, %v1572
        %v1574 = vpop.f32.mrf.mxu0
        %1575 = vdwg.mxu0
        %v1576 = vmax.f32 %v1573, 0.0
        %v1577 = vld [vmem:[%s9] sm:$0xff]
        %v1578 = vld [vmem:[%s9 + $0x8] sm:$0xff]
        %v1579 = vld [vmem:[%s9 + $0x10] sm:$0xff]
        %v1580 = vld [vmem:[%s9 + $0x18] sm:$0xff]
        %v1581 = vld [vmem:[%s9 + $0x20] sm:$0xff]
        %v1582 = vld [vmem:[%s9 + $0x28] sm:$0xff]
        %v1583 = vld [vmem:[%s9 + $0x30] sm:$0xff]
        %v1584 = vld [vmem:[%s9 + $0x38] sm:$0xff]
        %v1585 = vld [vmem:[%s10] sm:$0x1]
        %v1587 = vlaneseq
        %v1588 = vshrl.u32 %v1587, 7
        %v1589 = vsub.s32 0, %v1588
        %v1590 = vrot.slane %v1585, %v1589
        %vm1592 = vcmask 523264
        %v1594 = vsel %vm1592, %v1576, 0
        %1596 = vmatprep.subr.mxu0 0.0
        %1597 = vmatpush1.msra.mxu0 0.0
        %1598 = vmatprep.subr.mxu0 0.0
        %1599 = vmatpush1.msra.mxu0 0.0
        %1600 = vmatprep.subr.mxu0 0.0
        %1601 = vmatpush1.msra.mxu0 0.0
        %1602 = vmatprep.subr.mxu0 0.0
        %1603 = vmatpush1.msra.mxu0 0.0
        %1604 = vmatprep.subr.mxu0 0.0
        %1605 = vmatpush1.msra.mxu0 0.0
        %1606 = vmatprep.subr.mxu0 0.0
        %1607 = vmatpush1.msra.mxu0 0.0
        %1608 = vmatprep.subr.mxu0 0.0
        %1609 = vmatpush1.msra.mxu0 0.0
        %1610 = vmatprep.subr.mxu0 0.0
        %1611 = vmatpush1.msra.mxu0 0.0
        %1612 = vmatprep.subr.mxu0 0.0
        %1613 = vmatpush1.msra.mxu0 %v1584
        %1614 = vmatprep.subr.mxu0 0.0
        %1615 = vmatpush1.msra.mxu0 %v1583
        %1616 = vmatprep.subr.mxu0 0.0
        %1617 = vmatpush1.msra.mxu0 %v1582
        %1618 = vmatprep.subr.mxu0 0.0
        %1619 = vmatpush1.msra.mxu0 %v1581
        %1620 = vmatprep.subr.mxu0 0.0
        %1621 = vmatpush1.msra.mxu0 %v1580
        %1622 = vmatprep.subr.mxu0 0.0
        %1623 = vmatpush1.msra.mxu0 %v1579
        %1624 = vmatprep.subr.mxu0 0.0
        %1625 = vmatpush1.msra.mxu0 %v1578
        %1626 = vmatprep.subr.mxu0 0.0
        %1627 = vmatpush1.msra.mxu0 %v1577
        %1628 = vmatprep.subr.mxu0 0.0
        %1629 = vmatpush2.msra.mxu0 0.0
        %1630 = vmatprep.subr.mxu0 0.0
        %1631 = vmatpush2.msra.mxu0 0.0
        %1632 = vmatprep.subr.mxu0 0.0
        %1633 = vmatpush2.msra.mxu0 0.0
        %1634 = vmatprep.subr.mxu0 0.0
        %1635 = vmatpush2.msra.mxu0 0.0
        %1636 = vmatprep.subr.mxu0 0.0
        %1637 = vmatpush2.msra.mxu0 0.0
        %1638 = vmatprep.subr.mxu0 0.0
        %1639 = vmatpush2.msra.mxu0 0.0
        %1640 = vmatprep.subr.mxu0 0.0
        %1641 = vmatpush2.msra.mxu0 0.0
        %1642 = vmatprep.subr.mxu0 0.0
        %1643 = vmatpush2.msra.mxu0 0.0
        %1644 = vmatprep.subr.mxu0 0.0
        %1645 = vmatpush2.msra.mxu0 0.0
        %1646 = vmatprep.subr.mxu0 0.0
        %1647 = vmatpush2.msra.mxu0 0.0
        %1648 = vmatprep.subr.mxu0 0.0
        %1649 = vmatpush2.msra.mxu0 0.0
        %1650 = vmatprep.subr.mxu0 0.0
        %1651 = vmatpush2.msra.mxu0 0.0
        %1652 = vmatprep.subr.mxu0 0.0
        %1653 = vmatpush2.msra.mxu0 0.0
        %1654 = vmatprep.subr.mxu0 0.0
        %1655 = vmatpush2.msra.mxu0 0.0
        %1656 = vmatprep.subr.mxu0 0.0
        %1657 = vmatpush2.msra.mxu0 0.0
        %1658 = vmatprep.subr.mxu0 0.0
        %1659 = vmatpush2.msra.mxu0 0.0
        %1660 = vmatprep.mubr.f32.mxu0 0.0
        %1661 = vmatmul.mubr.f32.gmra.mxu0 %v1594
        %v1662 = vpop.f32.mrf.mxu0
        %v1663 = vadd.f32 %v1590, %v1662
        %v1664 = vpop.f32.mrf.mxu0
        %1665 = vdwg.mxu0
        %v1666 = vadd.f32 %v1464, %v1663
        %1667 = vst.msk [vmem:[%s401] sm:$0xff] %vm444, %v1666
        %p1668 = scmp.ne.s32.totalorder %s30, 1
        // Predicated region
        $region69: #{tpu_custom_call.1} parent=63 // pred_check
          %p1669 = pneg %p1668
        $region70: #{tpu_custom_call.1} parent=63 // pred_check_branch
          %1671 = sbr.rel (%p1669) target = $region72
        $region71: #{tpu_custom_call.1} parent=63 // pred_region
          %1672 = vset.pattern.permute.xlu0 16
          %1673 = vperm.xlu0 %1672, %v940
          %v1674 = vpop.permute.xlu0 %1673
          %1676 = vset.pattern.permute.xlu0 16
          %1677 = vperm.xlu0 %1676, %v941
          %v1678 = vpop.permute.xlu0 %1677
          %v1680 = vmul.f32 %v552, %v1674
          %v1681 = vmul.f32 %v557, %v1678
          %1682 = vset.pattern.permute.xlu0 17
          %1683 = vperm.xlu0 %1682, %v940
          %v1684 = vpop.permute.xlu0 %1683
          %1686 = vset.pattern.permute.xlu0 17
          %1687 = vperm.xlu0 %1686, %v941
          %v1688 = vpop.permute.xlu0 %1687
          %v1690 = vmul.f32 %v552, %v1684
          %v1691 = vmul.f32 %v557, %v1688
          %1692 = vset.pattern.permute.xlu0 18
          %1693 = vperm.xlu0 %1692, %v940
          %v1694 = vpop.permute.xlu0 %1693
          %1696 = vset.pattern.permute.xlu0 18
          %1697 = vperm.xlu0 %1696, %v941
          %v1698 = vpop.permute.xlu0 %1697
          %v1700 = vmul.f32 %v552, %v1694
          %v1701 = vmul.f32 %v557, %v1698
          %1702 = vset.pattern.permute.xlu0 19
          %1703 = vperm.xlu0 %1702, %v940
          %v1704 = vpop.permute.xlu0 %1703
          %1706 = vset.pattern.permute.xlu0 19
          %1707 = vperm.xlu0 %1706, %v941
          %v1708 = vpop.permute.xlu0 %1707
          %v1710 = vmul.f32 %v552, %v1704
          %v1711 = vmul.f32 %v557, %v1708
          %1712 = vset.pattern.permute.xlu0 20
          %1713 = vperm.xlu0 %1712, %v940
          %v1714 = vpop.permute.xlu0 %1713
          %1716 = vset.pattern.permute.xlu0 20
          %1717 = vperm.xlu0 %1716, %v941
          %v1718 = vpop.permute.xlu0 %1717
          %v1720 = vmul.f32 %v552, %v1714
          %v1721 = vmul.f32 %v557, %v1718
          %1722 = vset.pattern.permute.xlu0 21
          %1723 = vperm.xlu0 %1722, %v940
          %v1724 = vpop.permute.xlu0 %1723
          %1726 = vset.pattern.permute.xlu0 21
          %1727 = vperm.xlu0 %1726, %v941
          %v1728 = vpop.permute.xlu0 %1727
          %v1730 = vmul.f32 %v552, %v1724
          %v1731 = vmul.f32 %v557, %v1728
          %1732 = vset.pattern.permute.xlu0 22
          %1733 = vperm.xlu0 %1732, %v940
          %v1734 = vpop.permute.xlu0 %1733
          %1736 = vset.pattern.permute.xlu0 22
          %1737 = vperm.xlu0 %1736, %v941
          %v1738 = vpop.permute.xlu0 %1737
          %v1740 = vmul.f32 %v552, %v1734
          %v1741 = vmul.f32 %v557, %v1738
          %1742 = vset.pattern.permute.xlu0 23
          %1743 = vperm.xlu0 %1742, %v940
          %v1744 = vpop.permute.xlu0 %1743
          %1746 = vset.pattern.permute.xlu0 23
          %1747 = vperm.xlu0 %1746, %v941
          %v1748 = vpop.permute.xlu0 %1747
          %v1750 = vmul.f32 %v552, %v1744
          %v1751 = vmul.f32 %v557, %v1748
          %1752 = vrot.lane.b32.xlu0 %v552, 113
          %v1753 = vpop.permute.xlu0 %1752
          %1754 = vrot.lane.b32.xlu0 %v557, 113
          %v1755 = vpop.permute.xlu0 %1754
          %1760 = vrot.lane.b32.xlu0 %v1680, 121
          %v1761 = vpop.permute.xlu0 %1760
          %1762 = vrot.lane.b32.xlu0 %v1681, 121
          %v1763 = vpop.permute.xlu0 %1762
          %1768 = vrot.lane.b32.xlu0 %v1690, 1
          %v1769 = vpop.permute.xlu0 %1768
          %1770 = vrot.lane.b32.xlu0 %v1691, 1
          %v1771 = vpop.permute.xlu0 %1770
          %1776 = vrot.lane.b32.xlu0 %v1700, 9
          %v1777 = vpop.permute.xlu0 %1776
          %1778 = vrot.lane.b32.xlu0 %v1701, 9
          %v1779 = vpop.permute.xlu0 %1778
          %1784 = vrot.lane.b32.xlu0 %v1710, 17
          %v1785 = vpop.permute.xlu0 %1784
          %1786 = vrot.lane.b32.xlu0 %v1711, 17
          %v1787 = vpop.permute.xlu0 %1786
          %1792 = vrot.lane.b32.xlu0 %v1720, 25
          %v1793 = vpop.permute.xlu0 %1792
          %1794 = vrot.lane.b32.xlu0 %v1721, 25
          %v1795 = vpop.permute.xlu0 %1794
          %1800 = vrot.lane.b32.xlu0 %v1730, 33
          %v1801 = vpop.permute.xlu0 %1800
          %1802 = vrot.lane.b32.xlu0 %v1731, 33
          %v1803 = vpop.permute.xlu0 %1802
          %1808 = vrot.lane.b32.xlu0 %v1740, 41
          %v1809 = vpop.permute.xlu0 %1808
          %1810 = vrot.lane.b32.xlu0 %v1741, 41
          %v1811 = vpop.permute.xlu0 %1810
          %1816 = vrot.lane.b32.xlu0 %v1750, 49
          %v1817 = vpop.permute.xlu0 %1816
          %1818 = vrot.lane.b32.xlu0 %v1751, 49
          %v1819 = vpop.permute.xlu0 %1818
          %v1822 = vsel %vm1094, 1.0, %v1753
          %v1823 = vsel %vm1094, 1.0, %v1755
          %v1824 = vsel %vm1097, %v1822, %v1761
          %v1825 = vsel %vm1097, %v1823, %v1763
          %v1826 = vsel %vm1100, %v1824, %v1769
          %v1827 = vsel %vm1100, %v1825, %v1771
          %v1828 = vsel %vm1103, %v1826, %v1777
          %v1829 = vsel %vm1103, %v1827, %v1779
          %v1830 = vsel %vm1106, %v1828, %v1785
          %v1831 = vsel %vm1106, %v1829, %v1787
          %v1832 = vsel %vm1109, %v1830, %v1793
          %v1833 = vsel %vm1109, %v1831, %v1795
          %v1834 = vsel %vm1112, %v1832, %v1801
          %v1835 = vsel %vm1112, %v1833, %v1803
          %v1836 = vsel %vm1115, %v1834, %v1809
          %v1837 = vsel %vm1115, %v1835, %v1811
          %v1838 = vsel %vm1118, %v1836, %v1817
          %v1839 = vsel %vm1118, %v1837, %v1819
          %v1840 = vld [vmem:[#allocation2] sm:$0xff]
          %v1841 = vld [vmem:[#allocation2 + $0x8] sm:$0xff]
          %v1842 = vld [vmem:[#allocation2 + $0x10] sm:$0xff]
          %v1843 = vld [vmem:[#allocation2 + $0x18] sm:$0xff]
          %v1844 = vld [vmem:[#allocation2 + $0x20] sm:$0xff]
          %v1845 = vld [vmem:[#allocation2 + $0x28] sm:$0xff]
          %v1846 = vld [vmem:[#allocation2 + $0x30] sm:$0xff]
          %v1847 = vld [vmem:[#allocation2 + $0x38] sm:$0xff]
          %v1848 = vld [vmem:[#allocation2 + $0x40] sm:$0xff]
          %v1849 = vld [vmem:[#allocation2 + $0x48] sm:$0x1]
          %v1850 = vld [vmem:[#allocation2 + $0x50] sm:$0xff]
          %v1851 = vld [vmem:[#allocation2 + $0x58] sm:$0xff]
          %v1852 = vld [vmem:[#allocation2 + $0x60] sm:$0xff]
          %v1853 = vld [vmem:[#allocation2 + $0x68] sm:$0xff]
          %v1854 = vld [vmem:[#allocation2 + $0x70] sm:$0xff]
          %v1855 = vld [vmem:[#allocation2 + $0x78] sm:$0xff]
          %v1856 = vld [vmem:[#allocation2 + $0x80] sm:$0xff]
          %v1857 = vld [vmem:[#allocation2 + $0x88] sm:$0xff]
          %v1858 = vld [vmem:[#allocation2 + $0x90] sm:$0xff]
          %v1859 = vld [vmem:[#allocation2 + $0x98] sm:$0x1]
          %1860 = vxpose.xlu0.b32.start [1/16] %v1838, 128
          %1861 = vxpose.xlu0.b32.cont [2/16] 0.0, 128
          %1862 = vxpose.xlu0.b32.cont [3/16] 0.0, 128
          %1863 = vxpose.xlu0.b32.cont [4/16] 0.0, 128
          %1864 = vxpose.xlu0.b32.cont [5/16] 0.0, 128
          %1865 = vxpose.xlu0.b32.cont [6/16] 0.0, 128
          %1866 = vxpose.xlu0.b32.cont [7/16] 0.0, 128
          %1867 = vxpose.xlu0.b32.cont [8/16] 0.0, 128
          %1868 = vxpose.xlu0.b32.cont [9/16] 0.0, 128
          %1869 = vxpose.xlu0.b32.cont [10/16] 0.0, 128
          %1870 = vxpose.xlu0.b32.cont [11/16] 0.0, 128
          %1871 = vxpose.xlu0.b32.cont [12/16] 0.0, 128
          %1872 = vxpose.xlu0.b32.cont [13/16] 0.0, 128
          %1873 = vxpose.xlu0.b32.cont [14/16] 0.0, 128
          %1874 = vxpose.xlu0.b32.cont [15/16] 0.0, 128
          %1875 = vxpose.xlu0.b32.end [16/16] 0.0, 128
          %v1876 = vpop.trf.xlu0
          %v1877 = vpop.trf.xlu0
          %v1878 = vpop.trf.xlu0
          %v1879 = vpop.trf.xlu0
          %v1880 = vpop.trf.xlu0
          %v1881 = vpop.trf.xlu0
          %v1882 = vpop.trf.xlu0
          %v1883 = vpop.trf.xlu0
          %v1884 = vpop.trf.xlu0
          %v1885 = vpop.trf.xlu0
          %v1886 = vpop.trf.xlu0
          %v1887 = vpop.trf.xlu0
          %v1888 = vpop.trf.xlu0
          %v1889 = vpop.trf.xlu0
          %v1890 = vpop.trf.xlu0
          %v1891 = vpop.trf.xlu0
          %v1893 = vsel %vm573, %v1876, 0
          %v1896 = vsel %vm573, %v1877, 0
          %v1899 = vsel %vm573, %v1878, 0
          %v1902 = vsel %vm573, %v1879, 0
          %v1905 = vsel %vm573, %v1880, 0
          %v1908 = vsel %vm573, %v1881, 0
          %v1911 = vsel %vm573, %v1882, 0
          %v1914 = vsel %vm573, %v1883, 0
          %v1917 = vsel %vm573, %v1884, 0
          %v1920 = vsel %vm573, %v1885, 0
          %1922 = vmatprep.subr.mxu0 0.0
          %1923 = vmatpush1.msra.mxu0 0.0
          %1924 = vmatprep.subr.mxu0 0.0
          %1925 = vmatpush1.msra.mxu0 0.0
          %1926 = vmatprep.subr.mxu0 0.0
          %1927 = vmatpush1.msra.mxu0 0.0
          %1928 = vmatprep.subr.mxu0 0.0
          %1929 = vmatpush1.msra.mxu0 0.0
          %1930 = vmatprep.subr.mxu0 0.0
          %1931 = vmatpush1.msra.mxu0 0.0
          %1932 = vmatprep.subr.mxu0 0.0
          %1933 = vmatpush1.msra.mxu0 0.0
          %1934 = vmatprep.subr.mxu0 0.0
          %1935 = vmatpush1.msra.mxu0 0.0
          %1936 = vmatprep.subr.mxu0 0.0
          %1937 = vmatpush1.msra.mxu0 0.0
          %1938 = vmatprep.subr.mxu0 0.0
          %1939 = vmatpush1.msra.mxu0 0.0
          %1940 = vmatprep.subr.mxu0 0.0
          %1941 = vmatpush1.msra.mxu0 0.0
          %1942 = vmatprep.subr.mxu0 0.0
          %1943 = vmatpush1.msra.mxu0 0.0
          %1944 = vmatprep.subr.mxu0 0.0
          %1945 = vmatpush1.msra.mxu0 0.0
          %1946 = vmatprep.subr.mxu0 0.0
          %1947 = vmatpush1.msra.mxu0 0.0
          %1948 = vmatprep.subr.mxu0 0.0
          %1949 = vmatpush1.msra.mxu0 0.0
          %1950 = vmatprep.subr.mxu0 0.0
          %1951 = vmatpush1.msra.mxu0 0.0
          %1952 = vmatprep.subr.mxu0 0.0
          %1953 = vmatpush1.msra.mxu0 %v917
          %1954 = vmatprep.subr.mxu0 0.0
          %1955 = vmatpush2.msra.mxu0 0.0
          %1956 = vmatprep.subr.mxu0 0.0
          %1957 = vmatpush2.msra.mxu0 0.0
          %1958 = vmatprep.subr.mxu0 0.0
          %1959 = vmatpush2.msra.mxu0 0.0
          %1960 = vmatprep.subr.mxu0 0.0
          %1961 = vmatpush2.msra.mxu0 0.0
          %1962 = vmatprep.subr.mxu0 0.0
          %1963 = vmatpush2.msra.mxu0 0.0
          %1964 = vmatprep.subr.mxu0 0.0
          %1965 = vmatpush2.msra.mxu0 0.0
          %1966 = vmatprep.subr.mxu0 0.0
          %1967 = vmatpush2.msra.mxu0 0.0
          %1968 = vmatprep.subr.mxu0 0.0
          %1969 = vmatpush2.msra.mxu0 0.0
          %1970 = vmatprep.subr.mxu0 0.0
          %1971 = vmatpush2.msra.mxu0 0.0
          %1972 = vmatprep.subr.mxu0 0.0
          %1973 = vmatpush2.msra.mxu0 0.0
          %1974 = vmatprep.subr.mxu0 0.0
          %1975 = vmatpush2.msra.mxu0 0.0
          %1976 = vmatprep.subr.mxu0 0.0
          %1977 = vmatpush2.msra.mxu0 0.0
          %1978 = vmatprep.subr.mxu0 0.0
          %1979 = vmatpush2.msra.mxu0 0.0
          %1980 = vmatprep.subr.mxu0 0.0
          %1981 = vmatpush2.msra.mxu0 0.0
          %1982 = vmatprep.subr.mxu0 0.0
          %1983 = vmatpush2.msra.mxu0 0.0
          %1984 = vmatprep.subr.mxu0 0.0
          %1985 = vmatpush2.msra.mxu0 0.0
          %1986 = vmatprep.mubr.f32.mxu0 0.0
          %1987 = vmatmul.mubr.f32.gmra.mxu0 %v1893
          %v1988 = vpop.f32.mrf.mxu0
          %v1989 = vadd.f32 0.0, %v1988
          %v1990 = vpop.f32.mrf.mxu0
          %1991 = vmatprep.mubr.f32.mxu0 0.0
          %1992 = vmatmul.mubr.f32.gmra.mxu0 %v1896
          %v1993 = vpop.f32.mrf.mxu0
          %v1994 = vadd.f32 0.0, %v1993
          %v1995 = vpop.f32.mrf.mxu0
          %1996 = vmatprep.mubr.f32.mxu0 0.0
          %1997 = vmatmul.mubr.f32.gmra.mxu0 %v1899
          %v1998 = vpop.f32.mrf.mxu0
          %v1999 = vadd.f32 0.0, %v1998
          %v2000 = vpop.f32.mrf.mxu0
          %2001 = vmatprep.mubr.f32.mxu0 0.0
          %2002 = vmatmul.mubr.f32.gmra.mxu0 %v1902
          %v2003 = vpop.f32.mrf.mxu0
          %v2004 = vadd.f32 0.0, %v2003
          %v2005 = vpop.f32.mrf.mxu0
          %2006 = vmatprep.mubr.f32.mxu0 0.0
          %2007 = vmatmul.mubr.f32.gmra.mxu0 %v1905
          %v2008 = vpop.f32.mrf.mxu0
          %v2009 = vadd.f32 0.0, %v2008
          %v2010 = vpop.f32.mrf.mxu0
          %2011 = vmatprep.mubr.f32.mxu0 0.0
          %2012 = vmatmul.mubr.f32.gmra.mxu0 %v1908
          %v2013 = vpop.f32.mrf.mxu0
          %v2014 = vadd.f32 0.0, %v2013
          %v2015 = vpop.f32.mrf.mxu0
          %2016 = vmatprep.mubr.f32.mxu0 0.0
          %2017 = vmatmul.mubr.f32.gmra.mxu0 %v1911
          %v2018 = vpop.f32.mrf.mxu0
          %v2019 = vadd.f32 0.0, %v2018
          %v2020 = vpop.f32.mrf.mxu0
          %2021 = vmatprep.mubr.f32.mxu0 0.0
          %2022 = vmatmul.mubr.f32.gmra.mxu0 %v1914
          %v2023 = vpop.f32.mrf.mxu0
          %v2024 = vadd.f32 0.0, %v2023
          %v2025 = vpop.f32.mrf.mxu0
          %2026 = vmatprep.mubr.f32.mxu0 0.0
          %2027 = vmatmul.mubr.f32.gmra.mxu0 %v1917
          %v2028 = vpop.f32.mrf.mxu0
          %v2029 = vadd.f32 0.0, %v2028
          %v2030 = vpop.f32.mrf.mxu0
          %2031 = vmatprep.mubr.f32.mxu0 0.0
          %2032 = vmatmul.mubr.f32.gmra.mxu0 %v1920
          %v2033 = vpop.f32.mrf.mxu0
          %v2034 = vadd.f32 0.0, %v2033
          %v2035 = vpop.f32.mrf.mxu0
          %2036 = vdwg.mxu0
          %2037 = vxpose.xlu0.b32.start [1/16] %v1839, 128
          %2038 = vxpose.xlu0.b32.cont [2/16] 0.0, 128
          %2039 = vxpose.xlu0.b32.cont [3/16] 0.0, 128
          %2040 = vxpose.xlu0.b32.cont [4/16] 0.0, 128
          %2041 = vxpose.xlu0.b32.cont [5/16] 0.0, 128
          %2042 = vxpose.xlu0.b32.cont [6/16] 0.0, 128
          %2043 = vxpose.xlu0.b32.cont [7/16] 0.0, 128
          %2044 = vxpose.xlu0.b32.cont [8/16] 0.0, 128
          %2045 = vxpose.xlu0.b32.cont [9/16] 0.0, 128
          %2046 = vxpose.xlu0.b32.cont [10/16] 0.0, 128
          %2047 = vxpose.xlu0.b32.cont [11/16] 0.0, 128
          %2048 = vxpose.xlu0.b32.cont [12/16] 0.0, 128
          %2049 = vxpose.xlu0.b32.cont [13/16] 0.0, 128
          %2050 = vxpose.xlu0.b32.cont [14/16] 0.0, 128
          %2051 = vxpose.xlu0.b32.cont [15/16] 0.0, 128
          %2052 = vxpose.xlu0.b32.end [16/16] 0.0, 128
          %v2053 = vpop.trf.xlu0
          %v2054 = vpop.trf.xlu0
          %v2055 = vpop.trf.xlu0
          %v2056 = vpop.trf.xlu0
          %v2057 = vpop.trf.xlu0
          %v2058 = vpop.trf.xlu0
          %v2059 = vpop.trf.xlu0
          %v2060 = vpop.trf.xlu0
          %v2061 = vpop.trf.xlu0
          %v2062 = vpop.trf.xlu0
          %v2063 = vpop.trf.xlu0
          %v2064 = vpop.trf.xlu0
          %v2065 = vpop.trf.xlu0
          %v2066 = vpop.trf.xlu0
          %v2067 = vpop.trf.xlu0
          %v2068 = vpop.trf.xlu0
          %v2070 = vsel %vm573, %v2053, 0
          %v2073 = vsel %vm573, %v2054, 0
          %v2076 = vsel %vm573, %v2055, 0
          %v2079 = vsel %vm573, %v2056, 0
          %v2082 = vsel %vm573, %v2057, 0
          %v2085 = vsel %vm573, %v2058, 0
          %v2088 = vsel %vm573, %v2059, 0
          %v2091 = vsel %vm573, %v2060, 0
          %v2094 = vsel %vm573, %v2061, 0
          %v2097 = vsel %vm573, %v2062, 0
          %2099 = vmatprep.subr.mxu0 0.0
          %2100 = vmatpush1.msra.mxu0 0.0
          %2101 = vmatprep.subr.mxu0 0.0
          %2102 = vmatpush1.msra.mxu0 0.0
          %2103 = vmatprep.subr.mxu0 0.0
          %2104 = vmatpush1.msra.mxu0 0.0
          %2105 = vmatprep.subr.mxu0 0.0
          %2106 = vmatpush1.msra.mxu0 0.0
          %2107 = vmatprep.subr.mxu0 0.0
          %2108 = vmatpush1.msra.mxu0 0.0
          %2109 = vmatprep.subr.mxu0 0.0
          %2110 = vmatpush1.msra.mxu0 0.0
          %2111 = vmatprep.subr.mxu0 0.0
          %2112 = vmatpush1.msra.mxu0 0.0
          %2113 = vmatprep.subr.mxu0 0.0
          %2114 = vmatpush1.msra.mxu0 0.0
          %2115 = vmatprep.subr.mxu0 0.0
          %2116 = vmatpush1.msra.mxu0 0.0
          %2117 = vmatprep.subr.mxu0 0.0
          %2118 = vmatpush1.msra.mxu0 0.0
          %2119 = vmatprep.subr.mxu0 0.0
          %2120 = vmatpush1.msra.mxu0 0.0
          %2121 = vmatprep.subr.mxu0 0.0
          %2122 = vmatpush1.msra.mxu0 0.0
          %2123 = vmatprep.subr.mxu0 0.0
          %2124 = vmatpush1.msra.mxu0 0.0
          %2125 = vmatprep.subr.mxu0 0.0
          %2126 = vmatpush1.msra.mxu0 0.0
          %2127 = vmatprep.subr.mxu0 0.0
          %2128 = vmatpush1.msra.mxu0 0.0
          %2129 = vmatprep.subr.mxu0 0.0
          %2130 = vmatpush1.msra.mxu0 %v918
          %2131 = vmatprep.subr.mxu0 0.0
          %2132 = vmatpush2.msra.mxu0 0.0
          %2133 = vmatprep.subr.mxu0 0.0
          %2134 = vmatpush2.msra.mxu0 0.0
          %2135 = vmatprep.subr.mxu0 0.0
          %2136 = vmatpush2.msra.mxu0 0.0
          %2137 = vmatprep.subr.mxu0 0.0
          %2138 = vmatpush2.msra.mxu0 0.0
          %2139 = vmatprep.subr.mxu0 0.0
          %2140 = vmatpush2.msra.mxu0 0.0
          %2141 = vmatprep.subr.mxu0 0.0
          %2142 = vmatpush2.msra.mxu0 0.0
          %2143 = vmatprep.subr.mxu0 0.0
          %2144 = vmatpush2.msra.mxu0 0.0
          %2145 = vmatprep.subr.mxu0 0.0
          %2146 = vmatpush2.msra.mxu0 0.0
          %2147 = vmatprep.subr.mxu0 0.0
          %2148 = vmatpush2.msra.mxu0 0.0
          %2149 = vmatprep.subr.mxu0 0.0
          %2150 = vmatpush2.msra.mxu0 0.0
          %2151 = vmatprep.subr.mxu0 0.0
          %2152 = vmatpush2.msra.mxu0 0.0
          %2153 = vmatprep.subr.mxu0 0.0
          %2154 = vmatpush2.msra.mxu0 0.0
          %2155 = vmatprep.subr.mxu0 0.0
          %2156 = vmatpush2.msra.mxu0 0.0
          %2157 = vmatprep.subr.mxu0 0.0
          %2158 = vmatpush2.msra.mxu0 0.0
          %2159 = vmatprep.subr.mxu0 0.0
          %2160 = vmatpush2.msra.mxu0 0.0
          %2161 = vmatprep.subr.mxu0 0.0
          %2162 = vmatpush2.msra.mxu0 0.0
          %2163 = vmatprep.mubr.f32.mxu0 0.0
          %2164 = vmatmul.mubr.f32.gmra.mxu0 %v2070
          %v2165 = vpop.f32.mrf.mxu0
          %v2166 = vadd.f32 0.0, %v2165
          %v2167 = vpop.f32.mrf.mxu0
          %2168 = vmatprep.mubr.f32.mxu0 0.0
          %2169 = vmatmul.mubr.f32.gmra.mxu0 %v2073
          %v2170 = vpop.f32.mrf.mxu0
          %v2171 = vadd.f32 0.0, %v2170
          %v2172 = vpop.f32.mrf.mxu0
          %2173 = vmatprep.mubr.f32.mxu0 0.0
          %2174 = vmatmul.mubr.f32.gmra.mxu0 %v2076
          %v2175 = vpop.f32.mrf.mxu0
          %v2176 = vadd.f32 0.0, %v2175
          %v2177 = vpop.f32.mrf.mxu0
          %2178 = vmatprep.mubr.f32.mxu0 0.0
          %2179 = vmatmul.mubr.f32.gmra.mxu0 %v2079
          %v2180 = vpop.f32.mrf.mxu0
          %v2181 = vadd.f32 0.0, %v2180
          %v2182 = vpop.f32.mrf.mxu0
          %2183 = vmatprep.mubr.f32.mxu0 0.0
          %2184 = vmatmul.mubr.f32.gmra.mxu0 %v2082
          %v2185 = vpop.f32.mrf.mxu0
          %v2186 = vadd.f32 0.0, %v2185
          %v2187 = vpop.f32.mrf.mxu0
          %2188 = vmatprep.mubr.f32.mxu0 0.0
          %2189 = vmatmul.mubr.f32.gmra.mxu0 %v2085
          %v2190 = vpop.f32.mrf.mxu0
          %v2191 = vadd.f32 0.0, %v2190
          %v2192 = vpop.f32.mrf.mxu0
          %2193 = vmatprep.mubr.f32.mxu0 0.0
          %2194 = vmatmul.mubr.f32.gmra.mxu0 %v2088
          %v2195 = vpop.f32.mrf.mxu0
          %v2196 = vadd.f32 0.0, %v2195
          %v2197 = vpop.f32.mrf.mxu0
          %2198 = vmatprep.mubr.f32.mxu0 0.0
          %2199 = vmatmul.mubr.f32.gmra.mxu0 %v2091
          %v2200 = vpop.f32.mrf.mxu0
          %v2201 = vadd.f32 0.0, %v2200
          %v2202 = vpop.f32.mrf.mxu0
          %2203 = vmatprep.mubr.f32.mxu0 0.0
          %2204 = vmatmul.mubr.f32.gmra.mxu0 %v2094
          %v2205 = vpop.f32.mrf.mxu0
          %v2206 = vadd.f32 0.0, %v2205
          %v2207 = vpop.f32.mrf.mxu0
          %2208 = vmatprep.mubr.f32.mxu0 0.0
          %2209 = vmatmul.mubr.f32.gmra.mxu0 %v2097
          %v2210 = vpop.f32.mrf.mxu0
          %v2211 = vadd.f32 0.0, %v2210
          %v2212 = vpop.f32.mrf.mxu0
          %2213 = vdwg.mxu0
          %v2214 = vadd.f32 %v1840, %v1989
          %v2215 = vadd.f32 %v1841, %v1994
          %v2216 = vadd.f32 %v1842, %v1999
          %v2217 = vadd.f32 %v1843, %v2004
          %v2218 = vadd.f32 %v1844, %v2009
          %v2219 = vadd.f32 %v1845, %v2014
          %v2220 = vadd.f32 %v1846, %v2019
          %v2221 = vadd.f32 %v1847, %v2024
          %v2222 = vadd.f32 %v1848, %v2029
          %v2223 = vadd.f32 %v1849, %v2034
          %v2224 = vadd.f32 %v1850, %v2166
          %v2225 = vadd.f32 %v1851, %v2171
          %v2226 = vadd.f32 %v1852, %v2176
          %v2227 = vadd.f32 %v1853, %v2181
          %v2228 = vadd.f32 %v1854, %v2186
          %v2229 = vadd.f32 %v1855, %v2191
          %v2230 = vadd.f32 %v1856, %v2196
          %v2231 = vadd.f32 %v1857, %v2201
          %v2232 = vadd.f32 %v1858, %v2206
          %v2233 = vadd.f32 %v1859, %v2211
          %2234 = vst.msk [vmem:[#allocation2] sm:$0xff] %vm1097, %v2214
          %2235 = vst.msk [vmem:[#allocation2 + $0x8] sm:$0xff] %vm1097, %v2215
          %2236 = vst.msk [vmem:[#allocation2 + $0x10] sm:$0xff] %vm1097, %v2216
          %2237 = vst.msk [vmem:[#allocation2 + $0x18] sm:$0xff] %vm1097, %v2217
          %2238 = vst.msk [vmem:[#allocation2 + $0x20] sm:$0xff] %vm1097, %v2218
          %2239 = vst.msk [vmem:[#allocation2 + $0x28] sm:$0xff] %vm1097, %v2219
          %2240 = vst.msk [vmem:[#allocation2 + $0x30] sm:$0xff] %vm1097, %v2220
          %2241 = vst.msk [vmem:[#allocation2 + $0x38] sm:$0xff] %vm1097, %v2221
          %2242 = vst.msk [vmem:[#allocation2 + $0x40] sm:$0xff] %vm1097, %v2222
          %vm2243 = vcmask 65536
          %2244 = vst.msk [vmem:[#allocation2 + $0x48] sm:$0x1] %vm2243, %v2223
          %2245 = vst.msk [vmem:[#allocation2 + $0x50] sm:$0xff] %vm1097, %v2224
          %2246 = vst.msk [vmem:[#allocation2 + $0x58] sm:$0xff] %vm1097, %v2225
          %2247 = vst.msk [vmem:[#allocation2 + $0x60] sm:$0xff] %vm1097, %v2226
          %2248 = vst.msk [vmem:[#allocation2 + $0x68] sm:$0xff] %vm1097, %v2227
          %2249 = vst.msk [vmem:[#allocation2 + $0x70] sm:$0xff] %vm1097, %v2228
          %2250 = vst.msk [vmem:[#allocation2 + $0x78] sm:$0xff] %vm1097, %v2229
          %2251 = vst.msk [vmem:[#allocation2 + $0x80] sm:$0xff] %vm1097, %v2230
          %2252 = vst.msk [vmem:[#allocation2 + $0x88] sm:$0xff] %vm1097, %v2231
          %2253 = vst.msk [vmem:[#allocation2 + $0x90] sm:$0xff] %vm1097, %v2232
          %2254 = vst.msk [vmem:[#allocation2 + $0x98] sm:$0x1] %vm2243, %v2233
          %2257 = vst.msk [vmem:[#allocation3] sm:$0xff] %vm573, %v562
          %2258 = vst.msk [vmem:[#allocation3 + $0x8] sm:$0xff] %vm573, %v564
          %2259 = vst.msk [vmem:[#allocation4] sm:$0xff] %vm573, %v568
          %2260 = vst.msk [vmem:[#allocation4 + $0x8] sm:$0xff] %vm573, %v570
        $region72: #{tpu_custom_call.1} parent=63 // pred_fallthru
          _
        %s2261 = sand.u32 %s285, 1
        %s2262 = scalar_lea.sflag [#allocation6], %s2261
        %s2263 = sand.u32 %s285, 1
        %s2264 = smul.addr %s2263, 8
        %s2265 = scalar_lea.vmem [#allocation5], %s2264
        // Predicated region
        $region73: #{tpu_custom_call.1} parent=63 // pred_check
          %p2266 = pneg %p295
        $region74: #{tpu_custom_call.1} parent=63 // pred_check_branch
          %2268 = sbr.rel (%p2266) target = $region76
        $region75: #{tpu_custom_call.1} parent=63 // pred_region
          %s2270 = ssub.s32 128, 128
          %2271 = vsyncadd %s2262, %s2270
          %s2272 = smul.addr %s29, 2
          %s2273 = sadd.s32 %s30, %s2272
          %s2274 = smul.addr %s2273, 128
          %s2275 = scalar_lea.hbm %s11, %s2274
          %s2277 = sshll.u32 %s2265, 4
          %s2278 = int_to_ptr.vmem [resolvable:$true] %s2277
          %2280 = dma.vmem_to_hbm [thread:$0]  %s2278, 128, %s2275, %s2262
        $region76: #{tpu_custom_call.1} parent=63 // pred_fallthru
          _
      $region64: #{tpu_custom_call.1} parent=5 // pred_fallthru
        _
      %p2281 = scmp.le.s32.totalorder 2, %s20
      // Predicated region
      $region77: #{tpu_custom_call.1} parent=5 // pred_check
        %p2282 = pneg %p2281
      $region78: #{tpu_custom_call.1} parent=5 // pred_check_branch
        %2284 = sbr.rel (%p2282) target = $region80
      $region79: #{tpu_custom_call.1} parent=5 // pred_region
        %s2285 = ssub.s32 %s20, 2
        // Predicated region
        $region81: #{tpu_custom_call.1} parent=79 // pred_check
          %p2286 = pneg %p301
        $region82: #{tpu_custom_call.1} parent=79 // pred_check_branch
          %2288 = sbr.rel (%p2286) target = $region84
        $region83: #{tpu_custom_call.1} parent=79 // pred_region
          %s2289 = sand.u32 %s286, 1
          %s2290 = scalar_lea.sflag [#allocation6], %s2289
          %s2291 = sand.u32 %s286, 1
          %s2292 = smul.addr %s2291, 8
          %s2293 = scalar_lea.vmem [#allocation5], %s2292
          %2294 = dma.done %s2290, 128
        $region84: #{tpu_custom_call.1} parent=79 // pred_fallthru
          _
      $region80: #{tpu_custom_call.1} parent=5 // pred_fallthru
        _
    $region6: #{tpu_custom_call.1} parent=1 // loop_footer
      %s24 = sadd.s32 1, %s20
    $region7: #{tpu_custom_call.1} parent=1 // loop_footer_branch
      %19 = sbr.rel target = $region3
    $region8: #{tpu_custom_call.1} parent=1 // loop_exit
      _
    %2295 = vsyncpa [#allocation6], 1
    %s2296 = scalar_lea.sflag [#allocation6], 1
    %2297 = vsyncpa %s2296, 1

</llo_original>
